<compile_context>
chip_gen: v7x
topology: tpu7x:2x2x1
jax: 0.10.0
libtpu: 0.0.40
codegen_flags: <defaults>
</compile_context>

<pallas_src>
import functools

import numpy as np
import jax
import jax.numpy as jnp
from jax.experimental import pallas as pl
from jax.experimental.pallas import tpu as pltpu


# ----------------------------------------------------------------------------
# Pallas kernel: centered FFT -> data consistency -> centered inverse FFT,
# 24 bf16 MXU dots (hi/lo split, f32 accumulation) per image.
# ----------------------------------------------------------------------------
def _dc_kernel(x_ref, k0_ref, m_ref, gh_ref, gw_ref, o_ref, *, bpg):
    # x_ref : (B, 2, Hp, Wp) f32   image-domain real/imag
    # k0_ref: (B, 2, Hp, Wp) f32   sampled k-space real/imag (centered)
    # m_ref : (B, 1, Hp, Wp) f32   {0,1} sampling mask (shared by re/im)
    # gh_ref: (8, Hp, Hp)   bf16   [Re, Im, Re+Im, Re-Im] x {hi, lo} of G_H
    # gw_ref: (8, Wp, Wp)   bf16   same for G_W
    # o_ref : (B, 2, Hp, Wp) f32
    f32 = jnp.float32
    bf16 = jnp.bfloat16

    def gdot_l(idx, act_b):      # (G_H plane) @ act  — hi + lo bf16 dots
        return (jnp.dot(gh_ref[idx], act_b, preferred_element_type=f32)
                + jnp.dot(gh_ref[idx + 4], act_b, preferred_element_type=f32))

    def gdot_r(act_b, idx):      # act @ (G_W plane)
        return (jnp.dot(act_b, gw_ref[idx], preferred_element_type=f32)
                + jnp.dot(act_b, gw_ref[idx + 4], preferred_element_type=f32))

    for b in range(bpg):         # static unroll; images are independent
        zr = x_ref[b, 0]
        zi = x_ref[b, 1]

        # ---- forward centered ortho FFT, rows:  T = G_H @ Z  (Gauss 3-mult)
        zr_b = zr.astype(bf16)
        zi_b = zi.astype(bf16)
        zs_b = (zr + zi).astype(bf16)
        t1 = gdot_l(0, zr_b)
        t2 = gdot_l(1, zi_b)
        t3 = gdot_l(2, zs_b)
        tr = t1 - t2
        ti = t3 - t1 - t2

        # ---- cols:  K = T @ G_W
        tr_b = tr.astype(bf16)
        ti_b = ti.astype(bf16)
        ts_b = (tr + ti).astype(bf16)
        u1 = gdot_r(tr_b, 0)
        u2 = gdot_r(ti_b, 1)
        u3 = gdot_r(ts_b, 2)
        kr = u1 - u2
        ki = u3 - u1 - u2

        # ---- data consistency: where(mask, k0, k); mask is exact {0,1} f32,
        #      one compare shared by real/imag channels (f32 VPU path on v5e).
        keep = m_ref[b, 0] >= 0.5
        kr = jnp.where(keep, k0_ref[b, 0], kr)
        ki = jnp.where(keep, k0_ref[b, 1], ki)

        # ---- inverse centered ortho FFT, rows:  U = conj(G_H) @ K'
        #      Gauss with Ai = -Im(G): uses precomputed (Re - Im) plane (idx 3)
        kr_b = kr.astype(bf16)
        ki_b = ki.astype(bf16)
        ks_b = (kr + ki).astype(bf16)
        v1 = gdot_l(0, kr_b)
        v2 = gdot_l(1, ki_b)
        v3 = gdot_l(3, ks_b)
        ur = v1 + v2
        ui = v3 - v1 + v2

        # ---- cols:  X = U @ conj(G_W)
        ur_b = ur.astype(bf16)
        ui_b = ui.astype(bf16)
        us_b = (ur + ui).astype(bf16)
        w1 = gdot_r(ur_b, 0)
        w2 = gdot_r(ui_b, 1)
        w3 = gdot_r(us_b, 3)
        o_ref[b, 0] = w1 + w2
        o_ref[b, 1] = w3 - w1 + w2


# ----------------------------------------------------------------------------
# Host glue.
# ----------------------------------------------------------------------------
def _folded_dft_hilo(n, n_pad):
    """Shift-folded ortho DFT, packed as 8 bf16 planes (n_pad, n_pad):
       [Re, Im, Re+Im, Re-Im]_hi  then  [..]_lo  with  plane = hi + lo."""
    f = np.fft.fftshift(np.arange(n))
    ang = -2.0 * np.pi * np.outer(f, f) / n
    re = np.zeros((n_pad, n_pad), np.float32)
    im = np.zeros((n_pad, n_pad), np.float32)
    re[:n, :n] = (np.cos(ang) / np.sqrt(n)).astype(np.float32)
    im[:n, :n] = (np.sin(ang) / np.sqrt(n)).astype(np.float32)
    planes = jnp.asarray(np.stack([re, im, re + im, re - im]))   # (4, np, np) f32
    hi = planes.astype(jnp.bfloat16)
    lo = (planes - hi.astype(jnp.float32)).astype(jnp.bfloat16)
    return jnp.concatenate([hi, lo], axis=0)                     # (8, np, np) bf16


def data_consistency_in_kspace(x, k0, mask):
    """x, k0: (N, 2, H, W) float; mask: (N, 2, H, W) bool/float, nonzero => keep k0.
    Note: assumes mask[:, 0] == mask[:, 1] (true for ReconFormer / fastMRI masks)."""
    n, c, h, w = x.shape
    assert c == 2
    hp = -(-h // 8) * 8          # sublane-align H
    wp = -(-w // 128) * 128      # lane-align W (lane-dense, unmasked stores)

    x32 = x.astype(jnp.float32)
    k032 = k0.astype(jnp.float32)
    m32 = (mask[:, :1] != 0).astype(jnp.float32)      # single {0,1} plane

    aligned = (hp == h) and (wp == w)
    if not aligned:                                    # only repack when unaligned
        pad = ((0, 0), (0, 0), (0, hp - h), (0, wp - w))
        x32 = jnp.pad(x32, pad)
        k032 = jnp.pad(k032, pad)
        m32 = jnp.pad(m32, pad)

    gh = _folded_dft_hilo(h, hp)                       # (8, Hp, Hp) bf16
    gw = _folded_dft_hilo(w, wp)                       # (8, Wp, Wp) bf16

    # Images per grid step: amortize per-step overhead for small images, but
    # keep >= 2 grid steps so both v7x TensorCores get work on the parallel axis.
    bpg = 1
    if h <= 256 and w <= 256:
        for cand in (4, 2):
            if n % cand == 0 and n // cand >= 2:
                bpg = cand
                break
    grid = (n // bpg,)

    # Explicit VMEM budget: double-buffered IO tiles + G planes + live temps.
    io_bytes = bpg * 7 * hp * wp * 4                   # x(2)+k0(2)+mask(1)+out(2)
    g_bytes = (8 * hp * hp + 8 * wp * wp) * 2          # bf16 DFT planes
    tmp_bytes = bpg * 24 * hp * wp * 4                 # live per-stage temporaries
    vmem_limit = int(1.2 * (2 * io_bytes + 2 * g_bytes + tmp_bytes))
    vmem_limit = max(32 * 1024 * 1024, min(vmem_limit, 96 * 1024 * 1024))

    out = pl.pallas_call(
        functools.partial(_dc_kernel, bpg=bpg),
        out_shape=jax.ShapeDtypeStruct((n, 2, hp, wp), jnp.float32),
        grid=grid,
        in_specs=[
            pl.BlockSpec((bpg, 2, hp, wp), lambda i: (i, 0, 0, 0)),
            pl.BlockSpec((bpg, 2, hp, wp), lambda i: (i, 0, 0, 0)),
            pl.BlockSpec((bpg, 1, hp, wp), lambda i: (i, 0, 0, 0)),
            pl.BlockSpec((8, hp, hp), lambda i: (0, 0, 0)),
            pl.BlockSpec((8, wp, wp), lambda i: (0, 0, 0)),
        ],
        out_specs=pl.BlockSpec((bpg, 2, hp, wp), lambda i: (i, 0, 0, 0)),
        compiler_params=pltpu.CompilerParams(
            dimension_semantics=("parallel",),
            vmem_limit_bytes=vmem_limit),
    )(x32, k032, m32, gh, gw)

    if not aligned:
        out = out[:, :, :h, :w]
    return out


# ----------------------------------------------------------------------------
# Pure-JAX reference (fft-based, same math as the PyTorch module).
# ----------------------------------------------------------------------------
def reference_dc(x, k0, mask):
    ifs = lambda z: jnp.fft.ifftshift(z, axes=(-2, -1))
    fs = lambda z: jnp.fft.fftshift(z, axes=(-2, -1))
    z = x[:, 0] + 1j * x[:, 1]
    k = fs(jnp.fft.fft2(ifs(z), norm="ortho"))
    kr = jnp.where(mask[:, 0] != 0, k0[:, 0], k.real)
    ki = jnp.where(mask[:, 1] != 0, k0[:, 1], k.imag)
    img = fs(jnp.fft.ifft2(ifs(kr + 1j * ki), norm="ortho"))
    return jnp.stack([img.real, img.imag], axis=1).astype(jnp.float32)


if __name__ == "__main__":
    key = jax.random.PRNGKey(0)
    k1, k2, k3 = jax.random.split(key, 3)
    H, W = 16, 16
    dc_fn = jax.jit(data_consistency_in_kspace)

    # Case 1: N=2 -> one image per grid step (both TensorCores busy on v7x).
    N = 2
    x = jax.random.normal(k1, (N, 2, H, W), jnp.float32)
    k0 = jax.random.normal(k2, (N, 2, H, W), jnp.float32)
    mask = jnp.broadcast_to(jax.random.uniform(k3, (N, 1, 1, W)) > 0.5,
                            (N, 2, H, W))
    out = jax.block_until_ready(dc_fn(x, k0, mask))
    ref = reference_dc(x, k0, mask)
    assert out.shape == (N, 2, H, W)
    err = float(jnp.max(jnp.abs(out - ref)))
    assert err < 5e-2, f"max abs err {err}"

    # Case 2: N=4 -> exercises the multi-image-per-grid-step path (bpg=2).
    N2 = 4
    x2 = jax.random.normal(k1, (N2, 2, H, W), jnp.float32)
    k02 = jax.random.normal(k2, (N2, 2, H, W), jnp.float32)
    mask2 = jnp.broadcast_to(jax.random.uniform(k3, (N2, 1, 1, W)) > 0.5,
                             (N2, 2, H, W))
    out2 = jax.block_until_ready(dc_fn(x2, k02, mask2))
    ref2 = reference_dc(x2, k02, mask2)
    err2 = float(jnp.max(jnp.abs(out2 - ref2)))
    assert err2 < 5e-2, f"max abs err {err2}"

    print("KERNEL_OK")
</pallas_src>

<mosaic_0001>
module attributes {stable_mosaic.version = 11 : i64} {
  func.func @_dc_kernel(%arg0: i32, %arg1: memref<1x2x16x128xf32, #tpu.memory_space<vmem>>, %arg2: memref<1x2x16x128xf32, #tpu.memory_space<vmem>>, %arg3: memref<1x1x16x128xf32, #tpu.memory_space<vmem>>, %arg4: memref<8x16x16xbf16, #tpu.memory_space<vmem>>, %arg5: memref<8x128x128xbf16, #tpu.memory_space<vmem>>, %arg6: memref<1x2x16x128xf32, #tpu.memory_space<vmem>>) attributes {dimension_semantics = [#tpu.dimension_semantics<parallel>], iteration_bounds = array<i64: 2>, scalar_prefetch = 0 : i64, scratch_operands = 0 : i64, tpu.core_type = #tpu.core_type<tc>, window_params = [{transform_indices = @transform_0, window_bounds = array<i64: 1, 2, 16, 128>}, {transform_indices = @transform_1, window_bounds = array<i64: 1, 2, 16, 128>}, {transform_indices = @transform_2, window_bounds = array<i64: 1, 1, 16, 128>}, {pipeline_mode = #tpu.pipeline_mode<synchronous>, transform_indices = @transform_3, window_bounds = array<i64: 8, 16, 16>}, {pipeline_mode = #tpu.pipeline_mode<synchronous>, transform_indices = @transform_4, window_bounds = array<i64: 8, 128, 128>}, {transform_indices = @transform_5, window_bounds = array<i64: 1, 2, 16, 128>}]} {
    %c0 = arith.constant 0 : index
    %c0_0 = arith.constant 0 : index
    %c0_1 = arith.constant 0 : index
    %c0_2 = arith.constant 0 : index
    %0 = vector.load %arg1[%c0, %c0_0, %c0_1, %c0_2] : memref<1x2x16x128xf32, #tpu.memory_space<vmem>>, vector<1x1x16x128xf32>
    %1 = vector.shape_cast %0 : vector<1x1x16x128xf32> to vector<16x128xf32>
    %c0_3 = arith.constant 0 : index
    %c1 = arith.constant 1 : index
    %c0_4 = arith.constant 0 : index
    %c0_5 = arith.constant 0 : index
    %2 = vector.load %arg1[%c0_3, %c1, %c0_4, %c0_5] : memref<1x2x16x128xf32, #tpu.memory_space<vmem>>, vector<1x1x16x128xf32>
    %3 = vector.shape_cast %2 : vector<1x1x16x128xf32> to vector<16x128xf32>
    %4 = arith.truncf %1 : vector<16x128xf32> to vector<16x128xbf16>
    %5 = arith.truncf %3 : vector<16x128xf32> to vector<16x128xbf16>
    %6 = arith.addf %1, %3 : vector<16x128xf32>
    %7 = arith.truncf %6 : vector<16x128xf32> to vector<16x128xbf16>
    %c0_6 = arith.constant 0 : index
    %c0_7 = arith.constant 0 : index
    %c0_8 = arith.constant 0 : index
    %8 = vector.load %arg4[%c0_6, %c0_7, %c0_8] : memref<8x16x16xbf16, #tpu.memory_space<vmem>>, vector<1x16x16xbf16>
    %9 = vector.shape_cast %8 : vector<1x16x16xbf16> to vector<16x16xbf16>
    %cst = arith.constant dense<0.000000e+00> : vector<16x128xf32>
    %10 = tpu.matmul %9, %4, %cst {dimension_numbers = #tpu.dot_dimension_numbers<[1], [0], [0], [1], [0, 0, 1, 1], [], []>} : vector<16x16xbf16>, vector<16x128xbf16>, vector<16x128xf32> -> vector<16x128xf32>
    %c4 = arith.constant 4 : index
    %c0_9 = arith.constant 0 : index
    %c0_10 = arith.constant 0 : index
    %11 = vector.load %arg4[%c4, %c0_9, %c0_10] : memref<8x16x16xbf16, #tpu.memory_space<vmem>>, vector<1x16x16xbf16>
    %12 = vector.shape_cast %11 : vector<1x16x16xbf16> to vector<16x16xbf16>
    %cst_11 = arith.constant dense<0.000000e+00> : vector<16x128xf32>
    %13 = tpu.matmul %12, %4, %cst_11 {dimension_numbers = #tpu.dot_dimension_numbers<[1], [0], [0], [1], [0, 0, 1, 1], [], []>} : vector<16x16xbf16>, vector<16x128xbf16>, vector<16x128xf32> -> vector<16x128xf32>
    %14 = arith.addf %10, %13 : vector<16x128xf32>
    %c1_12 = arith.constant 1 : index
    %c0_13 = arith.constant 0 : index
    %c0_14 = arith.constant 0 : index
    %15 = vector.load %arg4[%c1_12, %c0_13, %c0_14] : memref<8x16x16xbf16, #tpu.memory_space<vmem>>, vector<1x16x16xbf16>
    %16 = vector.shape_cast %15 : vector<1x16x16xbf16> to vector<16x16xbf16>
    %cst_15 = arith.constant dense<0.000000e+00> : vector<16x128xf32>
    %17 = tpu.matmul %16, %5, %cst_15 {dimension_numbers = #tpu.dot_dimension_numbers<[1], [0], [0], [1], [0, 0, 1, 1], [], []>} : vector<16x16xbf16>, vector<16x128xbf16>, vector<16x128xf32> -> vector<16x128xf32>
    %c5 = arith.constant 5 : index
    %c0_16 = arith.constant 0 : index
    %c0_17 = arith.constant 0 : index
    %18 = vector.load %arg4[%c5, %c0_16, %c0_17] : memref<8x16x16xbf16, #tpu.memory_space<vmem>>, vector<1x16x16xbf16>
    %19 = vector.shape_cast %18 : vector<1x16x16xbf16> to vector<16x16xbf16>
    %cst_18 = arith.constant dense<0.000000e+00> : vector<16x128xf32>
    %20 = tpu.matmul %19, %5, %cst_18 {dimension_numbers = #tpu.dot_dimension_numbers<[1], [0], [0], [1], [0, 0, 1, 1], [], []>} : vector<16x16xbf16>, vector<16x128xbf16>, vector<16x128xf32> -> vector<16x128xf32>
    %21 = arith.addf %17, %20 : vector<16x128xf32>
    %c2 = arith.constant 2 : index
    %c0_19 = arith.constant 0 : index
    %c0_20 = arith.constant 0 : index
    %22 = vector.load %arg4[%c2, %c0_19, %c0_20] : memref<8x16x16xbf16, #tpu.memory_space<vmem>>, vector<1x16x16xbf16>
    %23 = vector.shape_cast %22 : vector<1x16x16xbf16> to vector<16x16xbf16>
    %cst_21 = arith.constant dense<0.000000e+00> : vector<16x128xf32>
    %24 = tpu.matmul %23, %7, %cst_21 {dimension_numbers = #tpu.dot_dimension_numbers<[1], [0], [0], [1], [0, 0, 1, 1], [], []>} : vector<16x16xbf16>, vector<16x128xbf16>, vector<16x128xf32> -> vector<16x128xf32>
    %c6 = arith.constant 6 : index
    %c0_22 = arith.constant 0 : index
    %c0_23 = arith.constant 0 : index
    %25 = vector.load %arg4[%c6, %c0_22, %c0_23] : memref<8x16x16xbf16, #tpu.memory_space<vmem>>, vector<1x16x16xbf16>
    %26 = vector.shape_cast %25 : vector<1x16x16xbf16> to vector<16x16xbf16>
    %cst_24 = arith.constant dense<0.000000e+00> : vector<16x128xf32>
    %27 = tpu.matmul %26, %7, %cst_24 {dimension_numbers = #tpu.dot_dimension_numbers<[1], [0], [0], [1], [0, 0, 1, 1], [], []>} : vector<16x16xbf16>, vector<16x128xbf16>, vector<16x128xf32> -> vector<16x128xf32>
    %28 = arith.addf %24, %27 : vector<16x128xf32>
    %29 = arith.subf %14, %21 : vector<16x128xf32>
    %30 = arith.subf %28, %14 : vector<16x128xf32>
    %31 = arith.subf %30, %21 : vector<16x128xf32>
    %32 = arith.truncf %29 : vector<16x128xf32> to vector<16x128xbf16>
    %33 = arith.truncf %31 : vector<16x128xf32> to vector<16x128xbf16>
    %34 = arith.addf %29, %31 : vector<16x128xf32>
    %35 = arith.truncf %34 : vector<16x128xf32> to vector<16x128xbf16>
    %c0_25 = arith.constant 0 : index
    %c0_26 = arith.constant 0 : index
    %c0_27 = arith.constant 0 : index
    %36 = vector.load %arg5[%c0_25, %c0_26, %c0_27] : memref<8x128x128xbf16, #tpu.memory_space<vmem>>, vector<1x128x128xbf16>
    %37 = vector.shape_cast %36 : vector<1x128x128xbf16> to vector<128x128xbf16>
    %cst_28 = arith.constant dense<0.000000e+00> : vector<16x128xf32>
    %38 = tpu.matmul %32, %37, %cst_28 {dimension_numbers = #tpu.dot_dimension_numbers<[1], [0], [0], [1], [0, 0, 1, 1], [], []>} : vector<16x128xbf16>, vector<128x128xbf16>, vector<16x128xf32> -> vector<16x128xf32>
    %c4_29 = arith.constant 4 : index
    %c0_30 = arith.constant 0 : index
    %c0_31 = arith.constant 0 : index
    %39 = vector.load %arg5[%c4_29, %c0_30, %c0_31] : memref<8x128x128xbf16, #tpu.memory_space<vmem>>, vector<1x128x128xbf16>
    %40 = vector.shape_cast %39 : vector<1x128x128xbf16> to vector<128x128xbf16>
    %cst_32 = arith.constant dense<0.000000e+00> : vector<16x128xf32>
    %41 = tpu.matmul %32, %40, %cst_32 {dimension_numbers = #tpu.dot_dimension_numbers<[1], [0], [0], [1], [0, 0, 1, 1], [], []>} : vector<16x128xbf16>, vector<128x128xbf16>, vector<16x128xf32> -> vector<16x128xf32>
    %42 = arith.addf %38, %41 : vector<16x128xf32>
    %c1_33 = arith.constant 1 : index
    %c0_34 = arith.constant 0 : index
    %c0_35 = arith.constant 0 : index
    %43 = vector.load %arg5[%c1_33, %c0_34, %c0_35] : memref<8x128x128xbf16, #tpu.memory_space<vmem>>, vector<1x128x128xbf16>
    %44 = vector.shape_cast %43 : vector<1x128x128xbf16> to vector<128x128xbf16>
    %cst_36 = arith.constant dense<0.000000e+00> : vector<16x128xf32>
    %45 = tpu.matmul %33, %44, %cst_36 {dimension_numbers = #tpu.dot_dimension_numbers<[1], [0], [0], [1], [0, 0, 1, 1], [], []>} : vector<16x128xbf16>, vector<128x128xbf16>, vector<16x128xf32> -> vector<16x128xf32>
    %c5_37 = arith.constant 5 : index
    %c0_38 = arith.constant 0 : index
    %c0_39 = arith.constant 0 : index
    %46 = vector.load %arg5[%c5_37, %c0_38, %c0_39] : memref<8x128x128xbf16, #tpu.memory_space<vmem>>, vector<1x128x128xbf16>
    %47 = vector.shape_cast %46 : vector<1x128x128xbf16> to vector<128x128xbf16>
    %cst_40 = arith.constant dense<0.000000e+00> : vector<16x128xf32>
    %48 = tpu.matmul %33, %47, %cst_40 {dimension_numbers = #tpu.dot_dimension_numbers<[1], [0], [0], [1], [0, 0, 1, 1], [], []>} : vector<16x128xbf16>, vector<128x128xbf16>, vector<16x128xf32> -> vector<16x128xf32>
    %49 = arith.addf %45, %48 : vector<16x128xf32>
    %c2_41 = arith.constant 2 : index
    %c0_42 = arith.constant 0 : index
    %c0_43 = arith.constant 0 : index
    %50 = vector.load %arg5[%c2_41, %c0_42, %c0_43] : memref<8x128x128xbf16, #tpu.memory_space<vmem>>, vector<1x128x128xbf16>
    %51 = vector.shape_cast %50 : vector<1x128x128xbf16> to vector<128x128xbf16>
    %cst_44 = arith.constant dense<0.000000e+00> : vector<16x128xf32>
    %52 = tpu.matmul %35, %51, %cst_44 {dimension_numbers = #tpu.dot_dimension_numbers<[1], [0], [0], [1], [0, 0, 1, 1], [], []>} : vector<16x128xbf16>, vector<128x128xbf16>, vector<16x128xf32> -> vector<16x128xf32>
    %c6_45 = arith.constant 6 : index
    %c0_46 = arith.constant 0 : index
    %c0_47 = arith.constant 0 : index
    %53 = vector.load %arg5[%c6_45, %c0_46, %c0_47] : memref<8x128x128xbf16, #tpu.memory_space<vmem>>, vector<1x128x128xbf16>
    %54 = vector.shape_cast %53 : vector<1x128x128xbf16> to vector<128x128xbf16>
    %cst_48 = arith.constant dense<0.000000e+00> : vector<16x128xf32>
    %55 = tpu.matmul %35, %54, %cst_48 {dimension_numbers = #tpu.dot_dimension_numbers<[1], [0], [0], [1], [0, 0, 1, 1], [], []>} : vector<16x128xbf16>, vector<128x128xbf16>, vector<16x128xf32> -> vector<16x128xf32>
    %56 = arith.addf %52, %55 : vector<16x128xf32>
    %57 = arith.subf %42, %49 : vector<16x128xf32>
    %58 = arith.subf %56, %42 : vector<16x128xf32>
    %59 = arith.subf %58, %49 : vector<16x128xf32>
    %c0_49 = arith.constant 0 : index
    %c0_50 = arith.constant 0 : index
    %c0_51 = arith.constant 0 : index
    %c0_52 = arith.constant 0 : index
    %60 = vector.load %arg3[%c0_49, %c0_50, %c0_51, %c0_52] : memref<1x1x16x128xf32, #tpu.memory_space<vmem>>, vector<1x1x16x128xf32>
    %61 = vector.shape_cast %60 : vector<1x1x16x128xf32> to vector<16x128xf32>
    %cst_53 = arith.constant 5.000000e-01 : f32
    %62 = vector.broadcast %cst_53 : f32 to vector<16x128xf32>
    %63 = arith.cmpf oge, %61, %62 : vector<16x128xf32>
    %c0_54 = arith.constant 0 : index
    %c0_55 = arith.constant 0 : index
    %c0_56 = arith.constant 0 : index
    %c0_57 = arith.constant 0 : index
    %64 = vector.load %arg2[%c0_54, %c0_55, %c0_56, %c0_57] : memref<1x2x16x128xf32, #tpu.memory_space<vmem>>, vector<1x1x16x128xf32>
    %65 = vector.shape_cast %64 : vector<1x1x16x128xf32> to vector<16x128xf32>
    %66 = arith.select %63, %65, %57 : vector<16x128xi1>, vector<16x128xf32>
    %c0_58 = arith.constant 0 : index
    %c1_59 = arith.constant 1 : index
    %c0_60 = arith.constant 0 : index
    %c0_61 = arith.constant 0 : index
    %67 = vector.load %arg2[%c0_58, %c1_59, %c0_60, %c0_61] : memref<1x2x16x128xf32, #tpu.memory_space<vmem>>, vector<1x1x16x128xf32>
    %68 = vector.shape_cast %67 : vector<1x1x16x128xf32> to vector<16x128xf32>
    %69 = arith.select %63, %68, %59 : vector<16x128xi1>, vector<16x128xf32>
    %70 = arith.truncf %66 : vector<16x128xf32> to vector<16x128xbf16>
    %71 = arith.truncf %69 : vector<16x128xf32> to vector<16x128xbf16>
    %72 = arith.addf %66, %69 : vector<16x128xf32>
    %73 = arith.truncf %72 : vector<16x128xf32> to vector<16x128xbf16>
    %c0_62 = arith.constant 0 : index
    %c0_63 = arith.constant 0 : index
    %c0_64 = arith.constant 0 : index
    %74 = vector.load %arg4[%c0_62, %c0_63, %c0_64] : memref<8x16x16xbf16, #tpu.memory_space<vmem>>, vector<1x16x16xbf16>
    %75 = vector.shape_cast %74 : vector<1x16x16xbf16> to vector<16x16xbf16>
    %cst_65 = arith.constant dense<0.000000e+00> : vector<16x128xf32>
    %76 = tpu.matmul %75, %70, %cst_65 {dimension_numbers = #tpu.dot_dimension_numbers<[1], [0], [0], [1], [0, 0, 1, 1], [], []>} : vector<16x16xbf16>, vector<16x128xbf16>, vector<16x128xf32> -> vector<16x128xf32>
    %c4_66 = arith.constant 4 : index
    %c0_67 = arith.constant 0 : index
    %c0_68 = arith.constant 0 : index
    %77 = vector.load %arg4[%c4_66, %c0_67, %c0_68] : memref<8x16x16xbf16, #tpu.memory_space<vmem>>, vector<1x16x16xbf16>
    %78 = vector.shape_cast %77 : vector<1x16x16xbf16> to vector<16x16xbf16>
    %cst_69 = arith.constant dense<0.000000e+00> : vector<16x128xf32>
    %79 = tpu.matmul %78, %70, %cst_69 {dimension_numbers = #tpu.dot_dimension_numbers<[1], [0], [0], [1], [0, 0, 1, 1], [], []>} : vector<16x16xbf16>, vector<16x128xbf16>, vector<16x128xf32> -> vector<16x128xf32>
    %80 = arith.addf %76, %79 : vector<16x128xf32>
    %c1_70 = arith.constant 1 : index
    %c0_71 = arith.constant 0 : index
    %c0_72 = arith.constant 0 : index
    %81 = vector.load %arg4[%c1_70, %c0_71, %c0_72] : memref<8x16x16xbf16, #tpu.memory_space<vmem>>, vector<1x16x16xbf16>
    %82 = vector.shape_cast %81 : vector<1x16x16xbf16> to vector<16x16xbf16>
    %cst_73 = arith.constant dense<0.000000e+00> : vector<16x128xf32>
    %83 = tpu.matmul %82, %71, %cst_73 {dimension_numbers = #tpu.dot_dimension_numbers<[1], [0], [0], [1], [0, 0, 1, 1], [], []>} : vector<16x16xbf16>, vector<16x128xbf16>, vector<16x128xf32> -> vector<16x128xf32>
    %c5_74 = arith.constant 5 : index
    %c0_75 = arith.constant 0 : index
    %c0_76 = arith.constant 0 : index
    %84 = vector.load %arg4[%c5_74, %c0_75, %c0_76] : memref<8x16x16xbf16, #tpu.memory_space<vmem>>, vector<1x16x16xbf16>
    %85 = vector.shape_cast %84 : vector<1x16x16xbf16> to vector<16x16xbf16>
    %cst_77 = arith.constant dense<0.000000e+00> : vector<16x128xf32>
    %86 = tpu.matmul %85, %71, %cst_77 {dimension_numbers = #tpu.dot_dimension_numbers<[1], [0], [0], [1], [0, 0, 1, 1], [], []>} : vector<16x16xbf16>, vector<16x128xbf16>, vector<16x128xf32> -> vector<16x128xf32>
    %87 = arith.addf %83, %86 : vector<16x128xf32>
    %c3 = arith.constant 3 : index
    %c0_78 = arith.constant 0 : index
    %c0_79 = arith.constant 0 : index
    %88 = vector.load %arg4[%c3, %c0_78, %c0_79] : memref<8x16x16xbf16, #tpu.memory_space<vmem>>, vector<1x16x16xbf16>
    %89 = vector.shape_cast %88 : vector<1x16x16xbf16> to vector<16x16xbf16>
    %cst_80 = arith.constant dense<0.000000e+00> : vector<16x128xf32>
    %90 = tpu.matmul %89, %73, %cst_80 {dimension_numbers = #tpu.dot_dimension_numbers<[1], [0], [0], [1], [0, 0, 1, 1], [], []>} : vector<16x16xbf16>, vector<16x128xbf16>, vector<16x128xf32> -> vector<16x128xf32>
    %c7 = arith.constant 7 : index
    %c0_81 = arith.constant 0 : index
    %c0_82 = arith.constant 0 : index
    %91 = vector.load %arg4[%c7, %c0_81, %c0_82] : memref<8x16x16xbf16, #tpu.memory_space<vmem>>, vector<1x16x16xbf16>
    %92 = vector.shape_cast %91 : vector<1x16x16xbf16> to vector<16x16xbf16>
    %cst_83 = arith.constant dense<0.000000e+00> : vector<16x128xf32>
    %93 = tpu.matmul %92, %73, %cst_83 {dimension_numbers = #tpu.dot_dimension_numbers<[1], [0], [0], [1], [0, 0, 1, 1], [], []>} : vector<16x16xbf16>, vector<16x128xbf16>, vector<16x128xf32> -> vector<16x128xf32>
    %94 = arith.addf %90, %93 : vector<16x128xf32>
    %95 = arith.addf %80, %87 : vector<16x128xf32>
    %96 = arith.subf %94, %80 : vector<16x128xf32>
    %97 = arith.addf %96, %87 : vector<16x128xf32>
    %98 = arith.truncf %95 : vector<16x128xf32> to vector<16x128xbf16>
    %99 = arith.truncf %97 : vector<16x128xf32> to vector<16x128xbf16>
    %100 = arith.addf %95, %97 : vector<16x128xf32>
    %101 = arith.truncf %100 : vector<16x128xf32> to vector<16x128xbf16>
    %c0_84 = arith.constant 0 : index
    %c0_85 = arith.constant 0 : index
    %c0_86 = arith.constant 0 : index
    %102 = vector.load %arg5[%c0_84, %c0_85, %c0_86] : memref<8x128x128xbf16, #tpu.memory_space<vmem>>, vector<1x128x128xbf16>
    %103 = vector.shape_cast %102 : vector<1x128x128xbf16> to vector<128x128xbf16>
    %cst_87 = arith.constant dense<0.000000e+00> : vector<16x128xf32>
    %104 = tpu.matmul %98, %103, %cst_87 {dimension_numbers = #tpu.dot_dimension_numbers<[1], [0], [0], [1], [0, 0, 1, 1], [], []>} : vector<16x128xbf16>, vector<128x128xbf16>, vector<16x128xf32> -> vector<16x128xf32>
    %c4_88 = arith.constant 4 : index
    %c0_89 = arith.constant 0 : index
    %c0_90 = arith.constant 0 : index
    %105 = vector.load %arg5[%c4_88, %c0_89, %c0_90] : memref<8x128x128xbf16, #tpu.memory_space<vmem>>, vector<1x128x128xbf16>
    %106 = vector.shape_cast %105 : vector<1x128x128xbf16> to vector<128x128xbf16>
    %cst_91 = arith.constant dense<0.000000e+00> : vector<16x128xf32>
    %107 = tpu.matmul %98, %106, %cst_91 {dimension_numbers = #tpu.dot_dimension_numbers<[1], [0], [0], [1], [0, 0, 1, 1], [], []>} : vector<16x128xbf16>, vector<128x128xbf16>, vector<16x128xf32> -> vector<16x128xf32>
    %108 = arith.addf %104, %107 : vector<16x128xf32>
    %c1_92 = arith.constant 1 : index
    %c0_93 = arith.constant 0 : index
    %c0_94 = arith.constant 0 : index
    %109 = vector.load %arg5[%c1_92, %c0_93, %c0_94] : memref<8x128x128xbf16, #tpu.memory_space<vmem>>, vector<1x128x128xbf16>
    %110 = vector.shape_cast %109 : vector<1x128x128xbf16> to vector<128x128xbf16>
    %cst_95 = arith.constant dense<0.000000e+00> : vector<16x128xf32>
    %111 = tpu.matmul %99, %110, %cst_95 {dimension_numbers = #tpu.dot_dimension_numbers<[1], [0], [0], [1], [0, 0, 1, 1], [], []>} : vector<16x128xbf16>, vector<128x128xbf16>, vector<16x128xf32> -> vector<16x128xf32>
    %c5_96 = arith.constant 5 : index
    %c0_97 = arith.constant 0 : index
    %c0_98 = arith.constant 0 : index
    %112 = vector.load %arg5[%c5_96, %c0_97, %c0_98] : memref<8x128x128xbf16, #tpu.memory_space<vmem>>, vector<1x128x128xbf16>
    %113 = vector.shape_cast %112 : vector<1x128x128xbf16> to vector<128x128xbf16>
    %cst_99 = arith.constant dense<0.000000e+00> : vector<16x128xf32>
    %114 = tpu.matmul %99, %113, %cst_99 {dimension_numbers = #tpu.dot_dimension_numbers<[1], [0], [0], [1], [0, 0, 1, 1], [], []>} : vector<16x128xbf16>, vector<128x128xbf16>, vector<16x128xf32> -> vector<16x128xf32>
    %115 = arith.addf %111, %114 : vector<16x128xf32>
    %c3_100 = arith.constant 3 : index
    %c0_101 = arith.constant 0 : index
    %c0_102 = arith.constant 0 : index
    %116 = vector.load %arg5[%c3_100, %c0_101, %c0_102] : memref<8x128x128xbf16, #tpu.memory_space<vmem>>, vector<1x128x128xbf16>
    %117 = vector.shape_cast %116 : vector<1x128x128xbf16> to vector<128x128xbf16>
    %cst_103 = arith.constant dense<0.000000e+00> : vector<16x128xf32>
    %118 = tpu.matmul %101, %117, %cst_103 {dimension_numbers = #tpu.dot_dimension_numbers<[1], [0], [0], [1], [0, 0, 1, 1], [], []>} : vector<16x128xbf16>, vector<128x128xbf16>, vector<16x128xf32> -> vector<16x128xf32>
    %c7_104 = arith.constant 7 : index
    %c0_105 = arith.constant 0 : index
    %c0_106 = arith.constant 0 : index
    %119 = vector.load %arg5[%c7_104, %c0_105, %c0_106] : memref<8x128x128xbf16, #tpu.memory_space<vmem>>, vector<1x128x128xbf16>
    %120 = vector.shape_cast %119 : vector<1x128x128xbf16> to vector<128x128xbf16>
    %cst_107 = arith.constant dense<0.000000e+00> : vector<16x128xf32>
    %121 = tpu.matmul %101, %120, %cst_107 {dimension_numbers = #tpu.dot_dimension_numbers<[1], [0], [0], [1], [0, 0, 1, 1], [], []>} : vector<16x128xbf16>, vector<128x128xbf16>, vector<16x128xf32> -> vector<16x128xf32>
    %122 = arith.addf %118, %121 : vector<16x128xf32>
    %123 = arith.addf %108, %115 : vector<16x128xf32>
    %c0_108 = arith.constant 0 : index
    %c0_109 = arith.constant 0 : index
    %c0_110 = arith.constant 0 : index
    %c0_111 = arith.constant 0 : index
    %124 = vector.load %arg6[%c0_108, %c0_109, %c0_110, %c0_111] : memref<1x2x16x128xf32, #tpu.memory_space<vmem>>, vector<1x1x16x128xf32>
    %125 = vector.shape_cast %124 : vector<1x1x16x128xf32> to vector<16x128xf32>
    %126 = vector.shape_cast %123 : vector<16x128xf32> to vector<1x1x16x128xf32>
    tpu.vector_store %arg6[%c0_108, %c0_109, %c0_110, %c0_111], %126 {strides = array<i32>} : memref<1x2x16x128xf32, #tpu.memory_space<vmem>>, vector<1x1x16x128xf32>,
    %127 = arith.subf %122, %108 : vector<16x128xf32>
    %128 = arith.addf %127, %115 : vector<16x128xf32>
    %c0_112 = arith.constant 0 : index
    %c1_113 = arith.constant 1 : index
    %c0_114 = arith.constant 0 : index
    %c0_115 = arith.constant 0 : index
    %129 = vector.load %arg6[%c0_112, %c1_113, %c0_114, %c0_115] : memref<1x2x16x128xf32, #tpu.memory_space<vmem>>, vector<1x1x16x128xf32>
    %130 = vector.shape_cast %129 : vector<1x1x16x128xf32> to vector<16x128xf32>
    %131 = vector.shape_cast %128 : vector<16x128xf32> to vector<1x1x16x128xf32>
    tpu.vector_store %arg6[%c0_112, %c1_113, %c0_114, %c0_115], %131 {strides = array<i32>} : memref<1x2x16x128xf32, #tpu.memory_space<vmem>>, vector<1x1x16x128xf32>,
    return
  }
  func.func @transform_0(%arg0: i32) -> (i32, i32, i32, i32) {
    %c0_i32 = arith.constant 0 : i32
    %c0_i32_0 = arith.constant 0 : i32
    %c0_i32_1 = arith.constant 0 : i32
    %c0_i32_2 = arith.constant 0 : i32
    return %arg0, %c0_i32, %c0_i32_0, %c0_i32_1 : i32, i32, i32, i32
  }
  func.func @transform_1(%arg0: i32) -> (i32, i32, i32, i32) {
    %c0_i32 = arith.constant 0 : i32
    %c0_i32_0 = arith.constant 0 : i32
    %c0_i32_1 = arith.constant 0 : i32
    %c0_i32_2 = arith.constant 0 : i32
    return %arg0, %c0_i32, %c0_i32_0, %c0_i32_1 : i32, i32, i32, i32
  }
  func.func @transform_2(%arg0: i32) -> (i32, i32, i32, i32) {
    %c0_i32 = arith.constant 0 : i32
    %c0_i32_0 = arith.constant 0 : i32
    %c0_i32_1 = arith.constant 0 : i32
    %c0_i32_2 = arith.constant 0 : i32
    return %arg0, %c0_i32, %c0_i32_0, %c0_i32_1 : i32, i32, i32, i32
  }
  func.func @transform_3(%arg0: i32) -> (i32, i32, i32) {
    %c0_i32 = arith.constant 0 : i32
    %c0_i32_0 = arith.constant 0 : i32
    %c0_i32_1 = arith.constant 0 : i32
    %c0_i32_2 = arith.constant 0 : i32
    return %c0_i32, %c0_i32_0, %c0_i32_1 : i32, i32, i32
  }
  func.func @transform_4(%arg0: i32) -> (i32, i32, i32) {
    %c0_i32 = arith.constant 0 : i32
    %c0_i32_0 = arith.constant 0 : i32
    %c0_i32_1 = arith.constant 0 : i32
    %c0_i32_2 = arith.constant 0 : i32
    return %c0_i32, %c0_i32_0, %c0_i32_1 : i32, i32, i32
  }
  func.func @transform_5(%arg0: i32) -> (i32, i32, i32, i32) {
    %c0_i32 = arith.constant 0 : i32
    %c0_i32_0 = arith.constant 0 : i32
    %c0_i32_1 = arith.constant 0 : i32
    %c0_i32_2 = arith.constant 0 : i32
    return %arg0, %c0_i32, %c0_i32_0, %c0_i32_1 : i32, i32, i32, i32
  }
}

</mosaic_0001>

<llo_original>
// kernel: data_consistency_in_kspace.1
$region0: #{data_consistency_in_kspace.1}
  #allocation0 [shape = 'u32[]', space=smem, size = 0x4, offset = 0x4, fixed_abs, tag = 'smem constant byte address 0x4 - core index']
  #allocation1 [shape = 'u32[144,128]{1,0:T(1,128)}', space=vmem, size = 0x12000, scoped, tag = 'internal scratch']
  %s0 = inlined_call_operand.vmem [shape: f32[2,2,16,128], index: 0, kind: input, shape index: {}]
  %s1 = inlined_call_operand.vmem [shape: f32[2,2,16,128], index: 1, kind: input, shape index: {}]
  %s2 = inlined_call_operand.vmem [shape: f32[2,1,16,128], index: 2, kind: input, shape index: {}]
  %s3 = inlined_call_operand.vmem [shape: bf16[8,16,16], index: 3, kind: input, shape index: {}]
  %s4 = inlined_call_operand.hbm [shape: bf16[8,128,128], index: 4, kind: input, shape index: {}]
  %s5 = inlined_call_operand.hbm [shape: f32[2,2,16,128], index: 5, kind: output, shape index: {}]
  %s6 = sld [smem:[#allocation0]]
  $region57: #{data_consistency_in_kspace.1} parent=0
    _
  %s8 = ssub.s32 1, %s6
  %s9 = scalar_select 0, %s8, %s6
  $region1: #{data_consistency_in_kspace.1} parent=0
    #allocation2 [shape = 'u8[262144]{0}', space=vmem, size = 0x40000, scoped, tag = 'input window, operand 4, single buffered']
    #allocation3 [shape = 's32[2]{0}', space=sflag, size = 0x8, scoped, tag = 'scoped memory for data_consistency_in_kspace.1']
    #allocation4 [shape = 's32[2]{0}', space=sflag, size = 0x8, scoped, tag = 'scoped memory for data_consistency_in_kspace.1']
    #allocation5 [shape = 'u8[32768]{0}', space=vmem, size = 0x8000, scoped, tag = 'output window, operand 0']
    %10 = vsyncpa [#allocation3], 0
    %11 = vsyncpa [#allocation4], 0
    %s12 = scalar_lea.sflag [#allocation4], 1
    %13 = vsyncpa %s12, 0
    loop: start=0, step=1, limit=4
    $region2: #{data_consistency_in_kspace.1} parent=1 // loop_pre_header
      _
    $region3: #{data_consistency_in_kspace.1} parent=1 // loop_header
      %s15 = sphi 0, %s19
      %p16 = scmp.ge.s32.totalorder %s15, 4
      %s25 = sphi 0, %s27
      %s28 = sphi 0, %s25
      %s29 = sphi 0, %s28
      %s45 = sphi 0, %s29
      %s51 = sphi 0, %s53
      %s54 = sphi 0, %s51
      %s55 = sphi 0, %s54
      %s71 = sphi 0, %s55
      %s77 = sphi 0, %s79
      %s80 = sphi 0, %s77
      %s81 = sphi 0, %s80
      %s97 = sphi 0, %s81
      %s101 = sphi 0, %s101
      %s103 = sphi 0, %s101
      %s104 = sphi 0, %s103
      %s118 = sphi 0, %s104
      %s122 = sphi 0, %s122
      %s124 = sphi 0, %s122
      %s125 = sphi 0, %s124
      %s139 = sphi 0, %s125
      %s145 = sphi 0, %s147
      %s148 = sphi 0, %s145
      %s149 = sphi 0, %s148
      %s165 = sphi 0, %s149
    $region4: #{data_consistency_in_kspace.1} parent=1 // loop_header_branch
      %18 = sbr.rel (%p16) target = $region8
    $region5: #{data_consistency_in_kspace.1} parent=1 // loop_body
      %s20 = ssub.s32 %s15, 1
      %s21 = ssub.s32 %s15, 2
      %s22 = sadd.s32 %s15, 1
      %s23 = ssub.s32 %s15, %s22
      %p24 = scmp.eq.s32.totalorder %s23, 0
      %s26 = sadd.s32 %s25, 1
      %s27 = scalar_select %p24, %s25, %s26
      %p30 = pneg %p24
      %p31 = scmp.eq.s32.totalorder %s15, 1
      %p32 = por %p30, %p31
      %p33 = scmp.ne.s32.totalorder %s25, %s28
      %p34 = scmp.eq.s32.totalorder %s15, 0
      %p35 = por %p33, %p34
      %p36 = scmp.ne.s32.totalorder %s25, %s28
      %p37 = scmp.eq.s32.totalorder %s20, 1
      %p38 = por %p36, %p37
      %p39 = scmp.ne.s32.totalorder %s28, %s29
      %p40 = scmp.eq.s32.totalorder %s20, 0
      %p41 = por %p39, %p40
      %p42 = scmp.ne.s32.totalorder %s28, %s29
      %p43 = scmp.eq.s32.totalorder %s21, 1
      %p44 = por %p42, %p43
      %p46 = scmp.ne.s32.totalorder %s29, %s45
      %p47 = scmp.eq.s32.totalorder %s21, 0
      %p48 = por %p46, %p47
      %s49 = ssub.s32 %s15, %s22
      %p50 = scmp.eq.s32.totalorder %s49, 0
      %s52 = sadd.s32 %s51, 1
      %s53 = scalar_select %p50, %s51, %s52
      %p56 = pneg %p50
      %p57 = scmp.eq.s32.totalorder %s15, 1
      %p58 = por %p56, %p57
      %p59 = scmp.ne.s32.totalorder %s51, %s54
      %p60 = scmp.eq.s32.totalorder %s15, 0
      %p61 = por %p59, %p60
      %p62 = scmp.ne.s32.totalorder %s51, %s54
      %p63 = scmp.eq.s32.totalorder %s20, 1
      %p64 = por %p62, %p63
      %p65 = scmp.ne.s32.totalorder %s54, %s55
      %p66 = scmp.eq.s32.totalorder %s20, 0
      %p67 = por %p65, %p66
      %p68 = scmp.ne.s32.totalorder %s54, %s55
      %p69 = scmp.eq.s32.totalorder %s21, 1
      %p70 = por %p68, %p69
      %p72 = scmp.ne.s32.totalorder %s55, %s71
      %p73 = scmp.eq.s32.totalorder %s21, 0
      %p74 = por %p72, %p73
      %s75 = ssub.s32 %s15, %s22
      %p76 = scmp.eq.s32.totalorder %s75, 0
      %s78 = sadd.s32 %s77, 1
      %s79 = scalar_select %p76, %s77, %s78
      %p82 = pneg %p76
      %p83 = scmp.eq.s32.totalorder %s15, 1
      %p84 = por %p82, %p83
      %p85 = scmp.ne.s32.totalorder %s77, %s80
      %p86 = scmp.eq.s32.totalorder %s15, 0
      %p87 = por %p85, %p86
      %p88 = scmp.ne.s32.totalorder %s77, %s80
      %p89 = scmp.eq.s32.totalorder %s20, 1
      %p90 = por %p88, %p89
      %p91 = scmp.ne.s32.totalorder %s80, %s81
      %p92 = scmp.eq.s32.totalorder %s20, 0
      %p93 = por %p91, %p92
      %p94 = scmp.ne.s32.totalorder %s80, %s81
      %p95 = scmp.eq.s32.totalorder %s21, 1
      %p96 = por %p94, %p95
      %p98 = scmp.ne.s32.totalorder %s81, %s97
      %p99 = scmp.eq.s32.totalorder %s21, 0
      %p100 = por %p98, %p99
      %s102 = sadd.s32 %s101, 1
      %p105 = scmp.eq.s32.totalorder %s15, 1
      %p106 = scmp.ne.s32.totalorder %s101, %s103
      %p107 = scmp.eq.s32.totalorder %s15, 0
      %p108 = por %p106, %p107
      %p109 = scmp.ne.s32.totalorder %s101, %s103
      %p110 = scmp.eq.s32.totalorder %s20, 1
      %p111 = por %p109, %p110
      %p112 = scmp.ne.s32.totalorder %s103, %s104
      %p113 = scmp.eq.s32.totalorder %s20, 0
      %p114 = por %p112, %p113
      %p115 = scmp.ne.s32.totalorder %s103, %s104
      %p116 = scmp.eq.s32.totalorder %s21, 1
      %p117 = por %p115, %p116
      %p119 = scmp.ne.s32.totalorder %s104, %s118
      %p120 = scmp.eq.s32.totalorder %s21, 0
      %p121 = por %p119, %p120
      %s123 = sadd.s32 %s122, 1
      %p126 = scmp.eq.s32.totalorder %s15, 1
      %p127 = scmp.ne.s32.totalorder %s122, %s124
      %p128 = scmp.eq.s32.totalorder %s15, 0
      %p129 = por %p127, %p128
      %p130 = scmp.ne.s32.totalorder %s122, %s124
      %p131 = scmp.eq.s32.totalorder %s20, 1
      %p132 = por %p130, %p131
      %p133 = scmp.ne.s32.totalorder %s124, %s125
      %p134 = scmp.eq.s32.totalorder %s20, 0
      %p135 = por %p133, %p134
      %p136 = scmp.ne.s32.totalorder %s124, %s125
      %p137 = scmp.eq.s32.totalorder %s21, 1
      %p138 = por %p136, %p137
      %p140 = scmp.ne.s32.totalorder %s125, %s139
      %p141 = scmp.eq.s32.totalorder %s21, 0
      %p142 = por %p140, %p141
      %s143 = ssub.s32 %s15, %s22
      %p144 = scmp.eq.s32.totalorder %s143, 0
      %s146 = sadd.s32 %s145, 1
      %s147 = scalar_select %p144, %s145, %s146
      %p150 = pneg %p144
      %p151 = scmp.eq.s32.totalorder %s15, 1
      %p152 = por %p150, %p151
      %p153 = scmp.ne.s32.totalorder %s145, %s148
      %p154 = scmp.eq.s32.totalorder %s15, 0
      %p155 = por %p153, %p154
      %p156 = scmp.ne.s32.totalorder %s145, %s148
      %p157 = scmp.eq.s32.totalorder %s20, 1
      %p158 = por %p156, %p157
      %p159 = scmp.ne.s32.totalorder %s148, %s149
      %p160 = scmp.eq.s32.totalorder %s20, 0
      %p161 = por %p159, %p160
      %p162 = scmp.ne.s32.totalorder %s148, %s149
      %p163 = scmp.eq.s32.totalorder %s21, 1
      %p164 = por %p162, %p163
      %p166 = scmp.ne.s32.totalorder %s149, %s165
      %p167 = scmp.eq.s32.totalorder %s21, 0
      %p168 = por %p166, %p167
      %p169 = scmp.le.s32.totalorder 1, %s15
      %p170 = scmp.lt.s32.totalorder %s15, 3
      %p171 = pnand %p169, %p170
      %p172 = pneg %p171
      // Predicated region
      $region9: #{data_consistency_in_kspace.1} parent=5 // pred_check
        _
      $region10: #{data_consistency_in_kspace.1} parent=5 // pred_check_branch
        %174 = sbr.rel (%p171) target = $region12
      $region11: #{data_consistency_in_kspace.1} parent=5 // pred_region
        %s175 = ssub.s32 %s15, 1
        // Predicated region
        $region13: #{data_consistency_in_kspace.1} parent=11 // pred_check
          %p176 = pneg %p114
        $region14: #{data_consistency_in_kspace.1} parent=11 // pred_check_branch
          %178 = sbr.rel (%p176) target = $region16
        $region15: #{data_consistency_in_kspace.1} parent=11 // pred_region
          _
        $region16: #{data_consistency_in_kspace.1} parent=11 // pred_fallthru
          _
        // Predicated region
        $region17: #{data_consistency_in_kspace.1} parent=11 // pred_check
          %p179 = pneg %p135
        $region18: #{data_consistency_in_kspace.1} parent=11 // pred_check_branch
          %181 = sbr.rel (%p179) target = $region20
        $region19: #{data_consistency_in_kspace.1} parent=11 // pred_region
          %s183 = ssub.s32 8192, 8192
          %184 = vsyncadd [#allocation3], %s183
          %s185 = sshll.u32 [#allocation2], 4
          %s186 = int_to_ptr.vmem [resolvable:$true] %s185
          %191 = dma.hbm_to_vmem [thread:$0]  %s4, 8192, %s186, [#allocation3], 64, 64, 4
        $region20: #{data_consistency_in_kspace.1} parent=11 // pred_fallthru
          _
      $region12: #{data_consistency_in_kspace.1} parent=5 // pred_fallthru
        _
      %p192 = scmp.lt.s32.totalorder %s15, 2
      // Predicated region
      $region21: #{data_consistency_in_kspace.1} parent=5 // pred_check
        %p193 = pneg %p192
      $region22: #{data_consistency_in_kspace.1} parent=5 // pred_check_branch
        %195 = sbr.rel (%p193) target = $region24
      $region23: #{data_consistency_in_kspace.1} parent=5 // pred_region
        // Predicated region
        $region25: #{data_consistency_in_kspace.1} parent=23 // pred_check
          %p196 = pneg %p35
        $region26: #{data_consistency_in_kspace.1} parent=23 // pred_check_branch
          %198 = sbr.rel (%p196) target = $region28
        $region27: #{data_consistency_in_kspace.1} parent=23 // pred_region
          %p199 = scmp.lt.s32.totalorder %s15, 1
          %s200 = scalar_select %p199, %s15, 1
          %s201 = smul.addr %s200, 4
          %s202 = smul.addr %s201, 8
          %s203 = scalar_lea.vmem %s0, %s202
        $region28: #{data_consistency_in_kspace.1} parent=23 // pred_fallthru
          _
        // Predicated region
        $region29: #{data_consistency_in_kspace.1} parent=23 // pred_check
          %p204 = pneg %p61
        $region30: #{data_consistency_in_kspace.1} parent=23 // pred_check_branch
          %206 = sbr.rel (%p204) target = $region32
        $region31: #{data_consistency_in_kspace.1} parent=23 // pred_region
          %p207 = scmp.lt.s32.totalorder %s15, 1
          %s208 = scalar_select %p207, %s15, 1
          %s209 = smul.addr %s208, 4
          %s210 = smul.addr %s209, 8
          %s211 = scalar_lea.vmem %s1, %s210
        $region32: #{data_consistency_in_kspace.1} parent=23 // pred_fallthru
          _
        // Predicated region
        $region33: #{data_consistency_in_kspace.1} parent=23 // pred_check
          %p212 = pneg %p87
        $region34: #{data_consistency_in_kspace.1} parent=23 // pred_check_branch
          %214 = sbr.rel (%p212) target = $region36
        $region35: #{data_consistency_in_kspace.1} parent=23 // pred_region
          %p215 = scmp.lt.s32.totalorder %s15, 1
          %s216 = scalar_select %p215, %s15, 1
          %s217 = smul.addr %s216, 2
          %s218 = smul.addr %s217, 8
          %s219 = scalar_lea.vmem %s2, %s218
        $region36: #{data_consistency_in_kspace.1} parent=23 // pred_fallthru
          _
      $region24: #{data_consistency_in_kspace.1} parent=5 // pred_fallthru
        _
      %p220 = scmp.le.s32.totalorder 1, %s15
      %p221 = scmp.lt.s32.totalorder %s15, 3
      %p222 = pnand %p220, %p221
      %p223 = pneg %p222
      // Predicated region
      $region37: #{data_consistency_in_kspace.1} parent=5 // pred_check
        _
      $region38: #{data_consistency_in_kspace.1} parent=5 // pred_check_branch
        %225 = sbr.rel (%p222) target = $region40
      $region39: #{data_consistency_in_kspace.1} parent=5 // pred_region
        %s226 = ssub.s32 %s15, 1
        // Predicated region
        $region41: #{data_consistency_in_kspace.1} parent=39 // pred_check
          %p227 = pneg %p135
        $region42: #{data_consistency_in_kspace.1} parent=39 // pred_check_branch
          %229 = sbr.rel (%p227) target = $region44
        $region43: #{data_consistency_in_kspace.1} parent=39 // pred_region
          %230 = dma.done [#allocation3], 8192
        $region44: #{data_consistency_in_kspace.1} parent=39 // pred_fallthru
          _
        %p231 = scmp.lt.s32.totalorder %s20, 1
        %s232 = scalar_select %p231, %s20, 1
        %s233 = smul.addr %s232, 4
        %s234 = smul.addr %s233, 8
        %s235 = scalar_lea.vmem %s0, %s234
        %p236 = pneg %p41
        %p237 = pneg %p38
        %p238 = scmp.lt.s32.totalorder %s20, 1
        %s239 = scalar_select %p238, %s20, 1
        %s240 = smul.addr %s239, 4
        %s241 = smul.addr %s240, 8
        %s242 = scalar_lea.vmem %s1, %s241
        %p243 = pneg %p67
        %p244 = pneg %p64
        %p245 = scmp.lt.s32.totalorder %s20, 1
        %s246 = scalar_select %p245, %s20, 1
        %s247 = smul.addr %s246, 2
        %s248 = smul.addr %s247, 8
        %s249 = scalar_lea.vmem %s2, %s248
        %p250 = pneg %p93
        %p251 = pneg %p90
        %p252 = pneg %p114
        %p253 = pneg %p111
        %p254 = pneg %p135
        %p255 = pneg %p132
        %p256 = pneg %p161
        %p257 = pneg %p158
        %s258 = sand.u32 %s148, 1
        %s259 = scalar_lea.sflag [#allocation4], %s258
        %s260 = sand.u32 %s148, 1
        %s261 = smul.addr %s260, 32
        %s262 = scalar_lea.vmem [#allocation5], %s261
        %p263 = scmp.lt.s32.totalorder %s20, 1
        %s264 = scalar_select %p263, %s20, 1
        %s265 = smul.addr %s264, 4
        %s266 = smul.addr %s265, 8
        %s267 = scalar_lea.vmem %s0, %s266
        %p268 = scmp.lt.s32.totalorder %s20, 1
        %s269 = scalar_select %p268, %s20, 1
        %s270 = smul.addr %s269, 4
        %s271 = smul.addr %s270, 8
        %s272 = scalar_lea.vmem %s1, %s271
        %p273 = scmp.lt.s32.totalorder %s20, 1
        %s274 = scalar_select %p273, %s20, 1
        %s275 = smul.addr %s274, 2
        %s276 = smul.addr %s275, 8
        %s277 = scalar_lea.vmem %s2, %s276
        %v279 = vld [vmem:[%s267] sm:$0xff]
        %v280 = vld [vmem:[%s267 + $0x8] sm:$0xff]
        %s281 = scalar_lea.vmem %s267, 16
        %v282 = vld [vmem:[%s281] sm:$0xff]
        %v283 = vld [vmem:[%s281 + $0x8] sm:$0xff]
        %v284 = vpack.c.bf16 %v280, %v279
        %v285 = vpack.c.bf16 %v283, %v282
        %v286 = vadd.f32 %v279, %v282
        %v287 = vadd.f32 %v280, %v283
        %v288 = vpack.c.bf16 %v287, %v286
        %v289 = vld [vmem:[%s3] sm:$0xf]
        %v290 = vld [vmem:[%s3 + $0x4] sm:$0xf]
        %s291 = scalar_lea.vmem %s3, 32
        %v292 = vld [vmem:[%s291] sm:$0xf]
        %v293 = vld [vmem:[%s291 + $0x4] sm:$0xf]
        %v296 = vunpack.c.l.b16 %v292
        %v297 = vunpack.c.l.b16 %v293
        %v298 = vpack.c.b16 %v297, %v296
        %vm299 = vcmask 130048
        %v301 = vsel %vm299, %v298, 0
        %303 = vmatprep.subr.bf16.mxu0 0
        %304 = vmatpush1.bf16.msra.mxu0 %v284
        %305 = vmatprep.subr.bf16.mxu0 0
        %306 = vmatpush1.bf16.msra.mxu0 0
        %307 = vmatprep.subr.bf16.mxu0 0
        %308 = vmatpush1.bf16.msra.mxu0 0
        %309 = vmatprep.subr.bf16.mxu0 0
        %310 = vmatpush1.bf16.msra.mxu0 0
        %311 = vmatprep.subr.bf16.mxu0 0
        %312 = vmatpush1.bf16.msra.mxu0 0
        %313 = vmatprep.subr.bf16.mxu0 0
        %314 = vmatpush1.bf16.msra.mxu0 0
        %315 = vmatprep.subr.bf16.mxu0 0
        %316 = vmatpush1.bf16.msra.mxu0 0
        %317 = vmatprep.subr.bf16.mxu0 0
        %318 = vmatpush1.bf16.msra.mxu0 0
        %319 = vmatprep.subr.bf16.mxu0 0
        %320 = vmatpush1.bf16.msra.mxu0 0
        %321 = vmatprep.subr.bf16.mxu0 0
        %322 = vmatpush1.bf16.msra.mxu0 0
        %323 = vmatprep.subr.bf16.mxu0 0
        %324 = vmatpush1.bf16.msra.mxu0 0
        %325 = vmatprep.subr.bf16.mxu0 0
        %326 = vmatpush1.bf16.msra.mxu0 0
        %327 = vmatprep.subr.bf16.mxu0 0
        %328 = vmatpush1.bf16.msra.mxu0 0
        %329 = vmatprep.subr.bf16.mxu0 0
        %330 = vmatpush1.bf16.msra.mxu0 0
        %331 = vmatprep.subr.bf16.mxu0 0
        %332 = vmatpush1.bf16.msra.mxu0 0
        %333 = vmatprep.subr.bf16.mxu0 0
        %334 = vmatpush1.bf16.msra.mxu0 0
        %335 = vmatprep.mubr.bf16.mxu0 0
        %336 = vmatmul.mubr.bf16.gmra.mrb[0].mxu0 %v301
        %v337 = vpop.f32.mrb[0].mxu0
        %v338 = vadd.f32 0.0, %v337
        %v339 = vpop.f32.mrb[0].mxu0
        %v340 = vpop.f32.mrb[0].mxu0
        %v341 = vadd.f32 0.0, %v340
        %v342 = vpop.f32.mrb[0].mxu0
        %343 = vdwg.mxu0
        %v346 = vunpack.c.l.b16 %v289
        %v347 = vunpack.c.l.b16 %v290
        %v348 = vpack.c.b16 %v347, %v346
        %v350 = vsel %vm299, %v348, 0
        %352 = vmatprep.subr.bf16.mxu0 0
        %353 = vmatpush1.bf16.msra.mxu0 %v284
        %354 = vmatprep.subr.bf16.mxu0 0
        %355 = vmatpush1.bf16.msra.mxu0 0
        %356 = vmatprep.subr.bf16.mxu0 0
        %357 = vmatpush1.bf16.msra.mxu0 0
        %358 = vmatprep.subr.bf16.mxu0 0
        %359 = vmatpush1.bf16.msra.mxu0 0
        %360 = vmatprep.subr.bf16.mxu0 0
        %361 = vmatpush1.bf16.msra.mxu0 0
        %362 = vmatprep.subr.bf16.mxu0 0
        %363 = vmatpush1.bf16.msra.mxu0 0
        %364 = vmatprep.subr.bf16.mxu0 0
        %365 = vmatpush1.bf16.msra.mxu0 0
        %366 = vmatprep.subr.bf16.mxu0 0
        %367 = vmatpush1.bf16.msra.mxu0 0
        %368 = vmatprep.subr.bf16.mxu0 0
        %369 = vmatpush1.bf16.msra.mxu0 0
        %370 = vmatprep.subr.bf16.mxu0 0
        %371 = vmatpush1.bf16.msra.mxu0 0
        %372 = vmatprep.subr.bf16.mxu0 0
        %373 = vmatpush1.bf16.msra.mxu0 0
        %374 = vmatprep.subr.bf16.mxu0 0
        %375 = vmatpush1.bf16.msra.mxu0 0
        %376 = vmatprep.subr.bf16.mxu0 0
        %377 = vmatpush1.bf16.msra.mxu0 0
        %378 = vmatprep.subr.bf16.mxu0 0
        %379 = vmatpush1.bf16.msra.mxu0 0
        %380 = vmatprep.subr.bf16.mxu0 0
        %381 = vmatpush1.bf16.msra.mxu0 0
        %382 = vmatprep.subr.bf16.mxu0 0
        %383 = vmatpush1.bf16.msra.mxu0 0
        %384 = vmatprep.mubr.bf16.mxu0 0
        %385 = vmatmul.mubr.bf16.gmra.mrb[0].mxu0 %v350
        %v386 = vpop.f32.mrb[0].mxu0
        %v387 = vadd.f32 %v338, %v386
        %v388 = vpop.f32.mrb[0].mxu0
        %v389 = vpop.f32.mrb[0].mxu0
        %v390 = vadd.f32 %v341, %v389
        %v391 = vpop.f32.mrb[0].mxu0
        %392 = vdwg.mxu0
        %s393 = scalar_lea.vmem %s3, 8
        %v394 = vld [vmem:[%s393] sm:$0xf]
        %v395 = vld [vmem:[%s393 + $0x4] sm:$0xf]
        %s396 = scalar_lea.vmem %s3, 40
        %v397 = vld [vmem:[%s396] sm:$0xf]
        %v398 = vld [vmem:[%s396 + $0x4] sm:$0xf]
        %v401 = vunpack.c.l.b16 %v397
        %v402 = vunpack.c.l.b16 %v398
        %v403 = vpack.c.b16 %v402, %v401
        %v405 = vsel %vm299, %v403, 0
        %407 = vmatprep.subr.bf16.mxu0 0
        %408 = vmatpush1.bf16.msra.mxu0 %v285
        %409 = vmatprep.subr.bf16.mxu0 0
        %410 = vmatpush1.bf16.msra.mxu0 0
        %411 = vmatprep.subr.bf16.mxu0 0
        %412 = vmatpush1.bf16.msra.mxu0 0
        %413 = vmatprep.subr.bf16.mxu0 0
        %414 = vmatpush1.bf16.msra.mxu0 0
        %415 = vmatprep.subr.bf16.mxu0 0
        %416 = vmatpush1.bf16.msra.mxu0 0
        %417 = vmatprep.subr.bf16.mxu0 0
        %418 = vmatpush1.bf16.msra.mxu0 0
        %419 = vmatprep.subr.bf16.mxu0 0
        %420 = vmatpush1.bf16.msra.mxu0 0
        %421 = vmatprep.subr.bf16.mxu0 0
        %422 = vmatpush1.bf16.msra.mxu0 0
        %423 = vmatprep.subr.bf16.mxu0 0
        %424 = vmatpush1.bf16.msra.mxu0 0
        %425 = vmatprep.subr.bf16.mxu0 0
        %426 = vmatpush1.bf16.msra.mxu0 0
        %427 = vmatprep.subr.bf16.mxu0 0
        %428 = vmatpush1.bf16.msra.mxu0 0
        %429 = vmatprep.subr.bf16.mxu0 0
        %430 = vmatpush1.bf16.msra.mxu0 0
        %431 = vmatprep.subr.bf16.mxu0 0
        %432 = vmatpush1.bf16.msra.mxu0 0
        %433 = vmatprep.subr.bf16.mxu0 0
        %434 = vmatpush1.bf16.msra.mxu0 0
        %435 = vmatprep.subr.bf16.mxu0 0
        %436 = vmatpush1.bf16.msra.mxu0 0
        %437 = vmatprep.subr.bf16.mxu0 0
        %438 = vmatpush1.bf16.msra.mxu0 0
        %439 = vmatprep.mubr.bf16.mxu0 0
        %440 = vmatmul.mubr.bf16.gmra.mrb[0].mxu0 %v405
        %v441 = vpop.f32.mrb[0].mxu0
        %v442 = vadd.f32 0.0, %v441
        %v443 = vpop.f32.mrb[0].mxu0
        %v444 = vpop.f32.mrb[0].mxu0
        %v445 = vadd.f32 0.0, %v444
        %v446 = vpop.f32.mrb[0].mxu0
        %447 = vdwg.mxu0
        %v450 = vunpack.c.l.b16 %v394
        %v451 = vunpack.c.l.b16 %v395
        %v452 = vpack.c.b16 %v451, %v450
        %v454 = vsel %vm299, %v452, 0
        %456 = vmatprep.subr.bf16.mxu0 0
        %457 = vmatpush1.bf16.msra.mxu0 %v285
        %458 = vmatprep.subr.bf16.mxu0 0
        %459 = vmatpush1.bf16.msra.mxu0 0
        %460 = vmatprep.subr.bf16.mxu0 0
        %461 = vmatpush1.bf16.msra.mxu0 0
        %462 = vmatprep.subr.bf16.mxu0 0
        %463 = vmatpush1.bf16.msra.mxu0 0
        %464 = vmatprep.subr.bf16.mxu0 0
        %465 = vmatpush1.bf16.msra.mxu0 0
        %466 = vmatprep.subr.bf16.mxu0 0
        %467 = vmatpush1.bf16.msra.mxu0 0
        %468 = vmatprep.subr.bf16.mxu0 0
        %469 = vmatpush1.bf16.msra.mxu0 0
        %470 = vmatprep.subr.bf16.mxu0 0
        %471 = vmatpush1.bf16.msra.mxu0 0
        %472 = vmatprep.subr.bf16.mxu0 0
        %473 = vmatpush1.bf16.msra.mxu0 0
        %474 = vmatprep.subr.bf16.mxu0 0
        %475 = vmatpush1.bf16.msra.mxu0 0
        %476 = vmatprep.subr.bf16.mxu0 0
        %477 = vmatpush1.bf16.msra.mxu0 0
        %478 = vmatprep.subr.bf16.mxu0 0
        %479 = vmatpush1.bf16.msra.mxu0 0
        %480 = vmatprep.subr.bf16.mxu0 0
        %481 = vmatpush1.bf16.msra.mxu0 0
        %482 = vmatprep.subr.bf16.mxu0 0
        %483 = vmatpush1.bf16.msra.mxu0 0
        %484 = vmatprep.subr.bf16.mxu0 0
        %485 = vmatpush1.bf16.msra.mxu0 0
        %486 = vmatprep.subr.bf16.mxu0 0
        %487 = vmatpush1.bf16.msra.mxu0 0
        %488 = vmatprep.mubr.bf16.mxu0 0
        %489 = vmatmul.mubr.bf16.gmra.mrb[0].mxu0 %v454
        %v490 = vpop.f32.mrb[0].mxu0
        %v491 = vadd.f32 %v442, %v490
        %v492 = vpop.f32.mrb[0].mxu0
        %v493 = vpop.f32.mrb[0].mxu0
        %v494 = vadd.f32 %v445, %v493
        %v495 = vpop.f32.mrb[0].mxu0
        %496 = vdwg.mxu0
        %s497 = scalar_lea.vmem %s3, 16
        %v498 = vld [vmem:[%s497] sm:$0xf]
        %v499 = vld [vmem:[%s497 + $0x4] sm:$0xf]
        %s500 = scalar_lea.vmem %s3, 48
        %v501 = vld [vmem:[%s500] sm:$0xf]
        %v502 = vld [vmem:[%s500 + $0x4] sm:$0xf]
        %v505 = vunpack.c.l.b16 %v501
        %v506 = vunpack.c.l.b16 %v502
        %v507 = vpack.c.b16 %v506, %v505
        %v509 = vsel %vm299, %v507, 0
        %511 = vmatprep.subr.bf16.mxu0 0
        %512 = vmatpush1.bf16.msra.mxu0 %v288
        %513 = vmatprep.subr.bf16.mxu0 0
        %514 = vmatpush1.bf16.msra.mxu0 0
        %515 = vmatprep.subr.bf16.mxu0 0
        %516 = vmatpush1.bf16.msra.mxu0 0
        %517 = vmatprep.subr.bf16.mxu0 0
        %518 = vmatpush1.bf16.msra.mxu0 0
        %519 = vmatprep.subr.bf16.mxu0 0
        %520 = vmatpush1.bf16.msra.mxu0 0
        %521 = vmatprep.subr.bf16.mxu0 0
        %522 = vmatpush1.bf16.msra.mxu0 0
        %523 = vmatprep.subr.bf16.mxu0 0
        %524 = vmatpush1.bf16.msra.mxu0 0
        %525 = vmatprep.subr.bf16.mxu0 0
        %526 = vmatpush1.bf16.msra.mxu0 0
        %527 = vmatprep.subr.bf16.mxu0 0
        %528 = vmatpush1.bf16.msra.mxu0 0
        %529 = vmatprep.subr.bf16.mxu0 0
        %530 = vmatpush1.bf16.msra.mxu0 0
        %531 = vmatprep.subr.bf16.mxu0 0
        %532 = vmatpush1.bf16.msra.mxu0 0
        %533 = vmatprep.subr.bf16.mxu0 0
        %534 = vmatpush1.bf16.msra.mxu0 0
        %535 = vmatprep.subr.bf16.mxu0 0
        %536 = vmatpush1.bf16.msra.mxu0 0
        %537 = vmatprep.subr.bf16.mxu0 0
        %538 = vmatpush1.bf16.msra.mxu0 0
        %539 = vmatprep.subr.bf16.mxu0 0
        %540 = vmatpush1.bf16.msra.mxu0 0
        %541 = vmatprep.subr.bf16.mxu0 0
        %542 = vmatpush1.bf16.msra.mxu0 0
        %543 = vmatprep.mubr.bf16.mxu0 0
        %544 = vmatmul.mubr.bf16.gmra.mrb[0].mxu0 %v509
        %v545 = vpop.f32.mrb[0].mxu0
        %v546 = vadd.f32 0.0, %v545
        %v547 = vpop.f32.mrb[0].mxu0
        %v548 = vpop.f32.mrb[0].mxu0
        %v549 = vadd.f32 0.0, %v548
        %v550 = vpop.f32.mrb[0].mxu0
        %551 = vdwg.mxu0
        %v554 = vunpack.c.l.b16 %v498
        %v555 = vunpack.c.l.b16 %v499
        %v556 = vpack.c.b16 %v555, %v554
        %v558 = vsel %vm299, %v556, 0
        %560 = vmatprep.subr.bf16.mxu0 0
        %561 = vmatpush1.bf16.msra.mxu0 %v288
        %562 = vmatprep.subr.bf16.mxu0 0
        %563 = vmatpush1.bf16.msra.mxu0 0
        %564 = vmatprep.subr.bf16.mxu0 0
        %565 = vmatpush1.bf16.msra.mxu0 0
        %566 = vmatprep.subr.bf16.mxu0 0
        %567 = vmatpush1.bf16.msra.mxu0 0
        %568 = vmatprep.subr.bf16.mxu0 0
        %569 = vmatpush1.bf16.msra.mxu0 0
        %570 = vmatprep.subr.bf16.mxu0 0
        %571 = vmatpush1.bf16.msra.mxu0 0
        %572 = vmatprep.subr.bf16.mxu0 0
        %573 = vmatpush1.bf16.msra.mxu0 0
        %574 = vmatprep.subr.bf16.mxu0 0
        %575 = vmatpush1.bf16.msra.mxu0 0
        %576 = vmatprep.subr.bf16.mxu0 0
        %577 = vmatpush1.bf16.msra.mxu0 0
        %578 = vmatprep.subr.bf16.mxu0 0
        %579 = vmatpush1.bf16.msra.mxu0 0
        %580 = vmatprep.subr.bf16.mxu0 0
        %581 = vmatpush1.bf16.msra.mxu0 0
        %582 = vmatprep.subr.bf16.mxu0 0
        %583 = vmatpush1.bf16.msra.mxu0 0
        %584 = vmatprep.subr.bf16.mxu0 0
        %585 = vmatpush1.bf16.msra.mxu0 0
        %586 = vmatprep.subr.bf16.mxu0 0
        %587 = vmatpush1.bf16.msra.mxu0 0
        %588 = vmatprep.subr.bf16.mxu0 0
        %589 = vmatpush1.bf16.msra.mxu0 0
        %590 = vmatprep.subr.bf16.mxu0 0
        %591 = vmatpush1.bf16.msra.mxu0 0
        %592 = vmatprep.mubr.bf16.mxu0 0
        %593 = vmatmul.mubr.bf16.gmra.mrb[0].mxu0 %v558
        %v594 = vpop.f32.mrb[0].mxu0
        %v595 = vadd.f32 %v546, %v594
        %v596 = vpop.f32.mrb[0].mxu0
        %v597 = vpop.f32.mrb[0].mxu0
        %v598 = vadd.f32 %v549, %v597
        %v599 = vpop.f32.mrb[0].mxu0
        %600 = vdwg.mxu0
        %v601 = vsub.f32 %v387, %v491
        %v602 = vsub.f32 %v390, %v494
        %v603 = vsub.f32 %v595, %v387
        %v604 = vsub.f32 %v598, %v390
        %v605 = vsub.f32 %v603, %v491
        %v606 = vsub.f32 %v604, %v494
        %v607 = vpack.c.bf16 %v602, %v601
        %v608 = vpack.c.bf16 %v606, %v605
        %v609 = vadd.f32 %v601, %v605
        %v610 = vadd.f32 %v602, %v606
        %v611 = vpack.c.bf16 %v610, %v609
        %v612 = vld [vmem:[#allocation2] sm:$0xf]
        %v613 = vld [vmem:[#allocation2 + $0x4] sm:$0xf]
        %v614 = vld [vmem:[#allocation2 + $0x8] sm:$0xf]
        %v615 = vld [vmem:[#allocation2 + $0xc] sm:$0xf]
        %v616 = vld [vmem:[#allocation2 + $0x10] sm:$0xf]
        %v617 = vld [vmem:[#allocation2 + $0x14] sm:$0xf]
        %v618 = vld [vmem:[#allocation2 + $0x18] sm:$0xf]
        %v619 = vld [vmem:[#allocation2 + $0x1c] sm:$0xf]
        %v620 = vld [vmem:[#allocation2 + $0x20] sm:$0xf]
        %v621 = vld [vmem:[#allocation2 + $0x24] sm:$0xf]
        %v622 = vld [vmem:[#allocation2 + $0x28] sm:$0xf]
        %v623 = vld [vmem:[#allocation2 + $0x2c] sm:$0xf]
        %v624 = vld [vmem:[#allocation2 + $0x30] sm:$0xf]
        %v625 = vld [vmem:[#allocation2 + $0x34] sm:$0xf]
        %v626 = vld [vmem:[#allocation2 + $0x38] sm:$0xf]
        %v627 = vld [vmem:[#allocation2 + $0x3c] sm:$0xf]
        %s628 = scalar_lea.vmem [#allocation2], 256
        %v629 = vld [vmem:[%s628] sm:$0xf]
        %v630 = vld [vmem:[%s628 + $0x4] sm:$0xf]
        %v631 = vld [vmem:[%s628 + $0x8] sm:$0xf]
        %v632 = vld [vmem:[%s628 + $0xc] sm:$0xf]
        %v633 = vld [vmem:[%s628 + $0x10] sm:$0xf]
        %v634 = vld [vmem:[%s628 + $0x14] sm:$0xf]
        %v635 = vld [vmem:[%s628 + $0x18] sm:$0xf]
        %v636 = vld [vmem:[%s628 + $0x1c] sm:$0xf]
        %v637 = vld [vmem:[%s628 + $0x20] sm:$0xf]
        %v638 = vld [vmem:[%s628 + $0x24] sm:$0xf]
        %v639 = vld [vmem:[%s628 + $0x28] sm:$0xf]
        %v640 = vld [vmem:[%s628 + $0x2c] sm:$0xf]
        %v641 = vld [vmem:[%s628 + $0x30] sm:$0xf]
        %v642 = vld [vmem:[%s628 + $0x34] sm:$0xf]
        %v643 = vld [vmem:[%s628 + $0x38] sm:$0xf]
        %v644 = vld [vmem:[%s628 + $0x3c] sm:$0xf]
        %v661 = vunpack.c.l.b16 %v629
        %v662 = vunpack.c.l.b16 %v630
        %v663 = vunpack.c.l.b16 %v631
        %v664 = vunpack.c.l.b16 %v632
        %v665 = vunpack.c.l.b16 %v633
        %v666 = vunpack.c.l.b16 %v634
        %v667 = vunpack.c.l.b16 %v635
        %v668 = vunpack.c.l.b16 %v636
        %v669 = vunpack.c.l.b16 %v637
        %v670 = vunpack.c.l.b16 %v638
        %v671 = vunpack.c.l.b16 %v639
        %v672 = vunpack.c.l.b16 %v640
        %v673 = vunpack.c.l.b16 %v641
        %v674 = vunpack.c.l.b16 %v642
        %v675 = vunpack.c.l.b16 %v643
        %v676 = vunpack.c.l.b16 %v644
        %v677 = vpack.c.b16 %v662, %v661
        %v678 = vpack.c.b16 %v664, %v663
        %v679 = vpack.c.b16 %v666, %v665
        %v680 = vpack.c.b16 %v668, %v667
        %v681 = vpack.c.b16 %v670, %v669
        %v682 = vpack.c.b16 %v672, %v671
        %v683 = vpack.c.b16 %v674, %v673
        %v684 = vpack.c.b16 %v676, %v675
        %693 = vmatprep.subr.bf16.mxu0 0
        %694 = vmatpush1.bf16.msra.mxu0 %v677
        %695 = vmatprep.subr.bf16.mxu0 0
        %696 = vmatpush1.bf16.msra.mxu0 %v678
        %697 = vmatprep.subr.bf16.mxu0 0
        %698 = vmatpush1.bf16.msra.mxu0 %v679
        %699 = vmatprep.subr.bf16.mxu0 0
        %700 = vmatpush1.bf16.msra.mxu0 %v680
        %701 = vmatprep.subr.bf16.mxu0 0
        %702 = vmatpush1.bf16.msra.mxu0 %v681
        %703 = vmatprep.subr.bf16.mxu0 0
        %704 = vmatpush1.bf16.msra.mxu0 %v682
        %705 = vmatprep.subr.bf16.mxu0 0
        %706 = vmatpush1.bf16.msra.mxu0 %v683
        %707 = vmatprep.subr.bf16.mxu0 0
        %708 = vmatpush1.bf16.msra.mxu0 %v684
        %709 = vmatprep.subr.bf16.mxu0 0
        %710 = vmatpush1.bf16.msra.mxu0 0
        %711 = vmatprep.subr.bf16.mxu0 0
        %712 = vmatpush1.bf16.msra.mxu0 0
        %713 = vmatprep.subr.bf16.mxu0 0
        %714 = vmatpush1.bf16.msra.mxu0 0
        %715 = vmatprep.subr.bf16.mxu0 0
        %716 = vmatpush1.bf16.msra.mxu0 0
        %717 = vmatprep.subr.bf16.mxu0 0
        %718 = vmatpush1.bf16.msra.mxu0 0
        %719 = vmatprep.subr.bf16.mxu0 0
        %720 = vmatpush1.bf16.msra.mxu0 0
        %721 = vmatprep.subr.bf16.mxu0 0
        %722 = vmatpush1.bf16.msra.mxu0 0
        %723 = vmatprep.subr.bf16.mxu0 0
        %724 = vmatpush1.bf16.msra.mxu0 0
        %725 = vmatprep.mubr.bf16.mxu0 0
        %726 = vmatmul.mubr.bf16.gmra.mrb[0].mxu0 %v607
        %v727 = vpop.f32.mrb[0].mxu0
        %v728 = vadd.f32 0.0, %v727
        %v729 = vpop.f32.mrb[0].mxu0
        %v730 = vpop.f32.mrb[0].mxu0
        %v731 = vadd.f32 0.0, %v730
        %v732 = vpop.f32.mrb[0].mxu0
        %733 = vdwg.mxu0
        %v750 = vunpack.c.l.b16 %v612
        %v751 = vunpack.c.l.b16 %v613
        %v752 = vunpack.c.l.b16 %v614
        %v753 = vunpack.c.l.b16 %v615
        %v754 = vunpack.c.l.b16 %v616
        %v755 = vunpack.c.l.b16 %v617
        %v756 = vunpack.c.l.b16 %v618
        %v757 = vunpack.c.l.b16 %v619
        %v758 = vunpack.c.l.b16 %v620
        %v759 = vunpack.c.l.b16 %v621
        %v760 = vunpack.c.l.b16 %v622
        %v761 = vunpack.c.l.b16 %v623
        %v762 = vunpack.c.l.b16 %v624
        %v763 = vunpack.c.l.b16 %v625
        %v764 = vunpack.c.l.b16 %v626
        %v765 = vunpack.c.l.b16 %v627
        %v766 = vpack.c.b16 %v751, %v750
        %v767 = vpack.c.b16 %v753, %v752
        %v768 = vpack.c.b16 %v755, %v754
        %v769 = vpack.c.b16 %v757, %v756
        %v770 = vpack.c.b16 %v759, %v758
        %v771 = vpack.c.b16 %v761, %v760
        %v772 = vpack.c.b16 %v763, %v762
        %v773 = vpack.c.b16 %v765, %v764
        %782 = vmatprep.subr.bf16.mxu0 0
        %783 = vmatpush1.bf16.msra.mxu0 %v766
        %784 = vmatprep.subr.bf16.mxu0 0
        %785 = vmatpush1.bf16.msra.mxu0 %v767
        %786 = vmatprep.subr.bf16.mxu0 0
        %787 = vmatpush1.bf16.msra.mxu0 %v768
        %788 = vmatprep.subr.bf16.mxu0 0
        %789 = vmatpush1.bf16.msra.mxu0 %v769
        %790 = vmatprep.subr.bf16.mxu0 0
        %791 = vmatpush1.bf16.msra.mxu0 %v770
        %792 = vmatprep.subr.bf16.mxu0 0
        %793 = vmatpush1.bf16.msra.mxu0 %v771
        %794 = vmatprep.subr.bf16.mxu0 0
        %795 = vmatpush1.bf16.msra.mxu0 %v772
        %796 = vmatprep.subr.bf16.mxu0 0
        %797 = vmatpush1.bf16.msra.mxu0 %v773
        %798 = vmatprep.subr.bf16.mxu0 0
        %799 = vmatpush1.bf16.msra.mxu0 0
        %800 = vmatprep.subr.bf16.mxu0 0
        %801 = vmatpush1.bf16.msra.mxu0 0
        %802 = vmatprep.subr.bf16.mxu0 0
        %803 = vmatpush1.bf16.msra.mxu0 0
        %804 = vmatprep.subr.bf16.mxu0 0
        %805 = vmatpush1.bf16.msra.mxu0 0
        %806 = vmatprep.subr.bf16.mxu0 0
        %807 = vmatpush1.bf16.msra.mxu0 0
        %808 = vmatprep.subr.bf16.mxu0 0
        %809 = vmatpush1.bf16.msra.mxu0 0
        %810 = vmatprep.subr.bf16.mxu0 0
        %811 = vmatpush1.bf16.msra.mxu0 0
        %812 = vmatprep.subr.bf16.mxu0 0
        %813 = vmatpush1.bf16.msra.mxu0 0
        %814 = vmatprep.mubr.bf16.mxu0 0
        %815 = vmatmul.mubr.bf16.gmra.mrb[0].mxu0 %v607
        %v816 = vpop.f32.mrb[0].mxu0
        %v817 = vadd.f32 %v728, %v816
        %v818 = vpop.f32.mrb[0].mxu0
        %v819 = vpop.f32.mrb[0].mxu0
        %v820 = vadd.f32 %v731, %v819
        %v821 = vpop.f32.mrb[0].mxu0
        %822 = vdwg.mxu0
        %s823 = scalar_lea.vmem [#allocation2], 64
        %v824 = vld [vmem:[%s823] sm:$0xf]
        %v825 = vld [vmem:[%s823 + $0x4] sm:$0xf]
        %v826 = vld [vmem:[%s823 + $0x8] sm:$0xf]
        %v827 = vld [vmem:[%s823 + $0xc] sm:$0xf]
        %v828 = vld [vmem:[%s823 + $0x10] sm:$0xf]
        %v829 = vld [vmem:[%s823 + $0x14] sm:$0xf]
        %v830 = vld [vmem:[%s823 + $0x18] sm:$0xf]
        %v831 = vld [vmem:[%s823 + $0x1c] sm:$0xf]
        %v832 = vld [vmem:[%s823 + $0x20] sm:$0xf]
        %v833 = vld [vmem:[%s823 + $0x24] sm:$0xf]
        %v834 = vld [vmem:[%s823 + $0x28] sm:$0xf]
        %v835 = vld [vmem:[%s823 + $0x2c] sm:$0xf]
        %v836 = vld [vmem:[%s823 + $0x30] sm:$0xf]
        %v837 = vld [vmem:[%s823 + $0x34] sm:$0xf]
        %v838 = vld [vmem:[%s823 + $0x38] sm:$0xf]
        %v839 = vld [vmem:[%s823 + $0x3c] sm:$0xf]
        %s840 = scalar_lea.vmem [#allocation2], 320
        %v841 = vld [vmem:[%s840] sm:$0xf]
        %v842 = vld [vmem:[%s840 + $0x4] sm:$0xf]
        %v843 = vld [vmem:[%s840 + $0x8] sm:$0xf]
        %v844 = vld [vmem:[%s840 + $0xc] sm:$0xf]
        %v845 = vld [vmem:[%s840 + $0x10] sm:$0xf]
        %v846 = vld [vmem:[%s840 + $0x14] sm:$0xf]
        %v847 = vld [vmem:[%s840 + $0x18] sm:$0xf]
        %v848 = vld [vmem:[%s840 + $0x1c] sm:$0xf]
        %v849 = vld [vmem:[%s840 + $0x20] sm:$0xf]
        %v850 = vld [vmem:[%s840 + $0x24] sm:$0xf]
        %v851 = vld [vmem:[%s840 + $0x28] sm:$0xf]
        %v852 = vld [vmem:[%s840 + $0x2c] sm:$0xf]
        %v853 = vld [vmem:[%s840 + $0x30] sm:$0xf]
        %v854 = vld [vmem:[%s840 + $0x34] sm:$0xf]
        %v855 = vld [vmem:[%s840 + $0x38] sm:$0xf]
        %v856 = vld [vmem:[%s840 + $0x3c] sm:$0xf]
        %v873 = vunpack.c.l.b16 %v841
        %v874 = vunpack.c.l.b16 %v842
        %v875 = vunpack.c.l.b16 %v843
        %v876 = vunpack.c.l.b16 %v844
        %v877 = vunpack.c.l.b16 %v845
        %v878 = vunpack.c.l.b16 %v846
        %v879 = vunpack.c.l.b16 %v847
        %v880 = vunpack.c.l.b16 %v848
        %v881 = vunpack.c.l.b16 %v849
        %v882 = vunpack.c.l.b16 %v850
        %v883 = vunpack.c.l.b16 %v851
        %v884 = vunpack.c.l.b16 %v852
        %v885 = vunpack.c.l.b16 %v853
        %v886 = vunpack.c.l.b16 %v854
        %v887 = vunpack.c.l.b16 %v855
        %v888 = vunpack.c.l.b16 %v856
        %v889 = vpack.c.b16 %v874, %v873
        %v890 = vpack.c.b16 %v876, %v875
        %v891 = vpack.c.b16 %v878, %v877
        %v892 = vpack.c.b16 %v880, %v879
        %v893 = vpack.c.b16 %v882, %v881
        %v894 = vpack.c.b16 %v884, %v883
        %v895 = vpack.c.b16 %v886, %v885
        %v896 = vpack.c.b16 %v888, %v887
        %905 = vmatprep.subr.bf16.mxu0 0
        %906 = vmatpush1.bf16.msra.mxu0 %v889
        %907 = vmatprep.subr.bf16.mxu0 0
        %908 = vmatpush1.bf16.msra.mxu0 %v890
        %909 = vmatprep.subr.bf16.mxu0 0
        %910 = vmatpush1.bf16.msra.mxu0 %v891
        %911 = vmatprep.subr.bf16.mxu0 0
        %912 = vmatpush1.bf16.msra.mxu0 %v892
        %913 = vmatprep.subr.bf16.mxu0 0
        %914 = vmatpush1.bf16.msra.mxu0 %v893
        %915 = vmatprep.subr.bf16.mxu0 0
        %916 = vmatpush1.bf16.msra.mxu0 %v894
        %917 = vmatprep.subr.bf16.mxu0 0
        %918 = vmatpush1.bf16.msra.mxu0 %v895
        %919 = vmatprep.subr.bf16.mxu0 0
        %920 = vmatpush1.bf16.msra.mxu0 %v896
        %921 = vmatprep.subr.bf16.mxu0 0
        %922 = vmatpush1.bf16.msra.mxu0 0
        %923 = vmatprep.subr.bf16.mxu0 0
        %924 = vmatpush1.bf16.msra.mxu0 0
        %925 = vmatprep.subr.bf16.mxu0 0
        %926 = vmatpush1.bf16.msra.mxu0 0
        %927 = vmatprep.subr.bf16.mxu0 0
        %928 = vmatpush1.bf16.msra.mxu0 0
        %929 = vmatprep.subr.bf16.mxu0 0
        %930 = vmatpush1.bf16.msra.mxu0 0
        %931 = vmatprep.subr.bf16.mxu0 0
        %932 = vmatpush1.bf16.msra.mxu0 0
        %933 = vmatprep.subr.bf16.mxu0 0
        %934 = vmatpush1.bf16.msra.mxu0 0
        %935 = vmatprep.subr.bf16.mxu0 0
        %936 = vmatpush1.bf16.msra.mxu0 0
        %937 = vmatprep.mubr.bf16.mxu0 0
        %938 = vmatmul.mubr.bf16.gmra.mrb[0].mxu0 %v608
        %v939 = vpop.f32.mrb[0].mxu0
        %v940 = vadd.f32 0.0, %v939
        %v941 = vpop.f32.mrb[0].mxu0
        %v942 = vpop.f32.mrb[0].mxu0
        %v943 = vadd.f32 0.0, %v942
        %v944 = vpop.f32.mrb[0].mxu0
        %945 = vdwg.mxu0
        %v962 = vunpack.c.l.b16 %v824
        %v963 = vunpack.c.l.b16 %v825
        %v964 = vunpack.c.l.b16 %v826
        %v965 = vunpack.c.l.b16 %v827
        %v966 = vunpack.c.l.b16 %v828
        %v967 = vunpack.c.l.b16 %v829
        %v968 = vunpack.c.l.b16 %v830
        %v969 = vunpack.c.l.b16 %v831
        %v970 = vunpack.c.l.b16 %v832
        %v971 = vunpack.c.l.b16 %v833
        %v972 = vunpack.c.l.b16 %v834
        %v973 = vunpack.c.l.b16 %v835
        %v974 = vunpack.c.l.b16 %v836
        %v975 = vunpack.c.l.b16 %v837
        %v976 = vunpack.c.l.b16 %v838
        %v977 = vunpack.c.l.b16 %v839
        %v978 = vpack.c.b16 %v963, %v962
        %v979 = vpack.c.b16 %v965, %v964
        %v980 = vpack.c.b16 %v967, %v966
        %v981 = vpack.c.b16 %v969, %v968
        %v982 = vpack.c.b16 %v971, %v970
        %v983 = vpack.c.b16 %v973, %v972
        %v984 = vpack.c.b16 %v975, %v974
        %v985 = vpack.c.b16 %v977, %v976
        %994 = vmatprep.subr.bf16.mxu0 0
        %995 = vmatpush1.bf16.msra.mxu0 %v978
        %996 = vmatprep.subr.bf16.mxu0 0
        %997 = vmatpush1.bf16.msra.mxu0 %v979
        %998 = vmatprep.subr.bf16.mxu0 0
        %999 = vmatpush1.bf16.msra.mxu0 %v980
        %1000 = vmatprep.subr.bf16.mxu0 0
        %1001 = vmatpush1.bf16.msra.mxu0 %v981
        %1002 = vmatprep.subr.bf16.mxu0 0
        %1003 = vmatpush1.bf16.msra.mxu0 %v982
        %1004 = vmatprep.subr.bf16.mxu0 0
        %1005 = vmatpush1.bf16.msra.mxu0 %v983
        %1006 = vmatprep.subr.bf16.mxu0 0
        %1007 = vmatpush1.bf16.msra.mxu0 %v984
        %1008 = vmatprep.subr.bf16.mxu0 0
        %1009 = vmatpush1.bf16.msra.mxu0 %v985
        %1010 = vmatprep.subr.bf16.mxu0 0
        %1011 = vmatpush1.bf16.msra.mxu0 0
        %1012 = vmatprep.subr.bf16.mxu0 0
        %1013 = vmatpush1.bf16.msra.mxu0 0
        %1014 = vmatprep.subr.bf16.mxu0 0
        %1015 = vmatpush1.bf16.msra.mxu0 0
        %1016 = vmatprep.subr.bf16.mxu0 0
        %1017 = vmatpush1.bf16.msra.mxu0 0
        %1018 = vmatprep.subr.bf16.mxu0 0
        %1019 = vmatpush1.bf16.msra.mxu0 0
        %1020 = vmatprep.subr.bf16.mxu0 0
        %1021 = vmatpush1.bf16.msra.mxu0 0
        %1022 = vmatprep.subr.bf16.mxu0 0
        %1023 = vmatpush1.bf16.msra.mxu0 0
        %1024 = vmatprep.subr.bf16.mxu0 0
        %1025 = vmatpush1.bf16.msra.mxu0 0
        %1026 = vmatprep.mubr.bf16.mxu0 0
        %1027 = vmatmul.mubr.bf16.gmra.mrb[0].mxu0 %v608
        %v1028 = vpop.f32.mrb[0].mxu0
        %v1029 = vadd.f32 %v940, %v1028
        %v1030 = vpop.f32.mrb[0].mxu0
        %v1031 = vpop.f32.mrb[0].mxu0
        %v1032 = vadd.f32 %v943, %v1031
        %v1033 = vpop.f32.mrb[0].mxu0
        %1034 = vdwg.mxu0
        %s1035 = scalar_lea.vmem [#allocation2], 128
        %v1036 = vld [vmem:[%s1035] sm:$0xf]
        %v1037 = vld [vmem:[%s1035 + $0x4] sm:$0xf]
        %v1038 = vld [vmem:[%s1035 + $0x8] sm:$0xf]
        %v1039 = vld [vmem:[%s1035 + $0xc] sm:$0xf]
        %v1040 = vld [vmem:[%s1035 + $0x10] sm:$0xf]
        %v1041 = vld [vmem:[%s1035 + $0x14] sm:$0xf]
        %v1042 = vld [vmem:[%s1035 + $0x18] sm:$0xf]
        %v1043 = vld [vmem:[%s1035 + $0x1c] sm:$0xf]
        %v1044 = vld [vmem:[%s1035 + $0x20] sm:$0xf]
        %v1045 = vld [vmem:[%s1035 + $0x24] sm:$0xf]
        %v1046 = vld [vmem:[%s1035 + $0x28] sm:$0xf]
        %v1047 = vld [vmem:[%s1035 + $0x2c] sm:$0xf]
        %v1048 = vld [vmem:[%s1035 + $0x30] sm:$0xf]
        %v1049 = vld [vmem:[%s1035 + $0x34] sm:$0xf]
        %v1050 = vld [vmem:[%s1035 + $0x38] sm:$0xf]
        %v1051 = vld [vmem:[%s1035 + $0x3c] sm:$0xf]
        %s1052 = scalar_lea.vmem [#allocation2], 384
        %v1053 = vld [vmem:[%s1052] sm:$0xf]
        %v1054 = vld [vmem:[%s1052 + $0x4] sm:$0xf]
        %v1055 = vld [vmem:[%s1052 + $0x8] sm:$0xf]
        %v1056 = vld [vmem:[%s1052 + $0xc] sm:$0xf]
        %v1057 = vld [vmem:[%s1052 + $0x10] sm:$0xf]
        %v1058 = vld [vmem:[%s1052 + $0x14] sm:$0xf]
        %v1059 = vld [vmem:[%s1052 + $0x18] sm:$0xf]
        %v1060 = vld [vmem:[%s1052 + $0x1c] sm:$0xf]
        %v1061 = vld [vmem:[%s1052 + $0x20] sm:$0xf]
        %v1062 = vld [vmem:[%s1052 + $0x24] sm:$0xf]
        %v1063 = vld [vmem:[%s1052 + $0x28] sm:$0xf]
        %v1064 = vld [vmem:[%s1052 + $0x2c] sm:$0xf]
        %v1065 = vld [vmem:[%s1052 + $0x30] sm:$0xf]
        %v1066 = vld [vmem:[%s1052 + $0x34] sm:$0xf]
        %v1067 = vld [vmem:[%s1052 + $0x38] sm:$0xf]
        %v1068 = vld [vmem:[%s1052 + $0x3c] sm:$0xf]
        %v1085 = vunpack.c.l.b16 %v1053
        %v1086 = vunpack.c.l.b16 %v1054
        %v1087 = vunpack.c.l.b16 %v1055
        %v1088 = vunpack.c.l.b16 %v1056
        %v1089 = vunpack.c.l.b16 %v1057
        %v1090 = vunpack.c.l.b16 %v1058
        %v1091 = vunpack.c.l.b16 %v1059
        %v1092 = vunpack.c.l.b16 %v1060
        %v1093 = vunpack.c.l.b16 %v1061
        %v1094 = vunpack.c.l.b16 %v1062
        %v1095 = vunpack.c.l.b16 %v1063
        %v1096 = vunpack.c.l.b16 %v1064
        %v1097 = vunpack.c.l.b16 %v1065
        %v1098 = vunpack.c.l.b16 %v1066
        %v1099 = vunpack.c.l.b16 %v1067
        %v1100 = vunpack.c.l.b16 %v1068
        %v1101 = vpack.c.b16 %v1086, %v1085
        %v1102 = vpack.c.b16 %v1088, %v1087
        %v1103 = vpack.c.b16 %v1090, %v1089
        %v1104 = vpack.c.b16 %v1092, %v1091
        %v1105 = vpack.c.b16 %v1094, %v1093
        %v1106 = vpack.c.b16 %v1096, %v1095
        %v1107 = vpack.c.b16 %v1098, %v1097
        %v1108 = vpack.c.b16 %v1100, %v1099
        %1117 = vmatprep.subr.bf16.mxu0 0
        %1118 = vmatpush1.bf16.msra.mxu0 %v1101
        %1119 = vmatprep.subr.bf16.mxu0 0
        %1120 = vmatpush1.bf16.msra.mxu0 %v1102
        %1121 = vmatprep.subr.bf16.mxu0 0
        %1122 = vmatpush1.bf16.msra.mxu0 %v1103
        %1123 = vmatprep.subr.bf16.mxu0 0
        %1124 = vmatpush1.bf16.msra.mxu0 %v1104
        %1125 = vmatprep.subr.bf16.mxu0 0
        %1126 = vmatpush1.bf16.msra.mxu0 %v1105
        %1127 = vmatprep.subr.bf16.mxu0 0
        %1128 = vmatpush1.bf16.msra.mxu0 %v1106
        %1129 = vmatprep.subr.bf16.mxu0 0
        %1130 = vmatpush1.bf16.msra.mxu0 %v1107
        %1131 = vmatprep.subr.bf16.mxu0 0
        %1132 = vmatpush1.bf16.msra.mxu0 %v1108
        %1133 = vmatprep.subr.bf16.mxu0 0
        %1134 = vmatpush1.bf16.msra.mxu0 0
        %1135 = vmatprep.subr.bf16.mxu0 0
        %1136 = vmatpush1.bf16.msra.mxu0 0
        %1137 = vmatprep.subr.bf16.mxu0 0
        %1138 = vmatpush1.bf16.msra.mxu0 0
        %1139 = vmatprep.subr.bf16.mxu0 0
        %1140 = vmatpush1.bf16.msra.mxu0 0
        %1141 = vmatprep.subr.bf16.mxu0 0
        %1142 = vmatpush1.bf16.msra.mxu0 0
        %1143 = vmatprep.subr.bf16.mxu0 0
        %1144 = vmatpush1.bf16.msra.mxu0 0
        %1145 = vmatprep.subr.bf16.mxu0 0
        %1146 = vmatpush1.bf16.msra.mxu0 0
        %1147 = vmatprep.subr.bf16.mxu0 0
        %1148 = vmatpush1.bf16.msra.mxu0 0
        %1149 = vmatprep.mubr.bf16.mxu0 0
        %1150 = vmatmul.mubr.bf16.gmra.mrb[0].mxu0 %v611
        %v1151 = vpop.f32.mrb[0].mxu0
        %v1152 = vadd.f32 0.0, %v1151
        %v1153 = vpop.f32.mrb[0].mxu0
        %v1154 = vpop.f32.mrb[0].mxu0
        %v1155 = vadd.f32 0.0, %v1154
        %v1156 = vpop.f32.mrb[0].mxu0
        %1157 = vdwg.mxu0
        %v1174 = vunpack.c.l.b16 %v1036
        %v1175 = vunpack.c.l.b16 %v1037
        %v1176 = vunpack.c.l.b16 %v1038
        %v1177 = vunpack.c.l.b16 %v1039
        %v1178 = vunpack.c.l.b16 %v1040
        %v1179 = vunpack.c.l.b16 %v1041
        %v1180 = vunpack.c.l.b16 %v1042
        %v1181 = vunpack.c.l.b16 %v1043
        %v1182 = vunpack.c.l.b16 %v1044
        %v1183 = vunpack.c.l.b16 %v1045
        %v1184 = vunpack.c.l.b16 %v1046
        %v1185 = vunpack.c.l.b16 %v1047
        %v1186 = vunpack.c.l.b16 %v1048
        %v1187 = vunpack.c.l.b16 %v1049
        %v1188 = vunpack.c.l.b16 %v1050
        %v1189 = vunpack.c.l.b16 %v1051
        %v1190 = vpack.c.b16 %v1175, %v1174
        %v1191 = vpack.c.b16 %v1177, %v1176
        %v1192 = vpack.c.b16 %v1179, %v1178
        %v1193 = vpack.c.b16 %v1181, %v1180
        %v1194 = vpack.c.b16 %v1183, %v1182
        %v1195 = vpack.c.b16 %v1185, %v1184
        %v1196 = vpack.c.b16 %v1187, %v1186
        %v1197 = vpack.c.b16 %v1189, %v1188
        %1206 = vmatprep.subr.bf16.mxu0 0
        %1207 = vmatpush1.bf16.msra.mxu0 %v1190
        %1208 = vmatprep.subr.bf16.mxu0 0
        %1209 = vmatpush1.bf16.msra.mxu0 %v1191
        %1210 = vmatprep.subr.bf16.mxu0 0
        %1211 = vmatpush1.bf16.msra.mxu0 %v1192
        %1212 = vmatprep.subr.bf16.mxu0 0
        %1213 = vmatpush1.bf16.msra.mxu0 %v1193
        %1214 = vmatprep.subr.bf16.mxu0 0
        %1215 = vmatpush1.bf16.msra.mxu0 %v1194
        %1216 = vmatprep.subr.bf16.mxu0 0
        %1217 = vmatpush1.bf16.msra.mxu0 %v1195
        %1218 = vmatprep.subr.bf16.mxu0 0
        %1219 = vmatpush1.bf16.msra.mxu0 %v1196
        %1220 = vmatprep.subr.bf16.mxu0 0
        %1221 = vmatpush1.bf16.msra.mxu0 %v1197
        %1222 = vmatprep.subr.bf16.mxu0 0
        %1223 = vmatpush1.bf16.msra.mxu0 0
        %1224 = vmatprep.subr.bf16.mxu0 0
        %1225 = vmatpush1.bf16.msra.mxu0 0
        %1226 = vmatprep.subr.bf16.mxu0 0
        %1227 = vmatpush1.bf16.msra.mxu0 0
        %1228 = vmatprep.subr.bf16.mxu0 0
        %1229 = vmatpush1.bf16.msra.mxu0 0
        %1230 = vmatprep.subr.bf16.mxu0 0
        %1231 = vmatpush1.bf16.msra.mxu0 0
        %1232 = vmatprep.subr.bf16.mxu0 0
        %1233 = vmatpush1.bf16.msra.mxu0 0
        %1234 = vmatprep.subr.bf16.mxu0 0
        %1235 = vmatpush1.bf16.msra.mxu0 0
        %1236 = vmatprep.subr.bf16.mxu0 0
        %1237 = vmatpush1.bf16.msra.mxu0 0
        %1238 = vmatprep.mubr.bf16.mxu0 0
        %1239 = vmatmul.mubr.bf16.gmra.mrb[0].mxu0 %v611
        %v1240 = vpop.f32.mrb[0].mxu0
        %v1241 = vadd.f32 %v1152, %v1240
        %v1242 = vpop.f32.mrb[0].mxu0
        %v1243 = vpop.f32.mrb[0].mxu0
        %v1244 = vadd.f32 %v1155, %v1243
        %v1245 = vpop.f32.mrb[0].mxu0
        %1246 = vdwg.mxu0
        %v1247 = vsub.f32 %v817, %v1029
        %v1248 = vsub.f32 %v820, %v1032
        %v1249 = vsub.f32 %v1241, %v817
        %v1250 = vsub.f32 %v1244, %v820
        %v1251 = vsub.f32 %v1249, %v1029
        %v1252 = vsub.f32 %v1250, %v1032
        %v1253 = vld [vmem:[%s277] sm:$0xff]
        %v1254 = vld [vmem:[%s277 + $0x8] sm:$0xff]
        %vm1255 = vcmp.ge.f32.partialorder %v1253, 0.5
        %vm1256 = vcmp.ge.f32.partialorder %v1254, 0.5
        %v1257 = vld [vmem:[%s272] sm:$0xff]
        %v1258 = vld [vmem:[%s272 + $0x8] sm:$0xff]
        %v1259 = vsel %vm1255, %v1257, %v1247
        %v1260 = vsel %vm1256, %v1258, %v1248
        %s1261 = scalar_lea.vmem %s272, 16
        %v1262 = vld [vmem:[%s1261] sm:$0xff]
        %v1263 = vld [vmem:[%s1261 + $0x8] sm:$0xff]
        %v1264 = vsel %vm1255, %v1262, %v1251
        %v1265 = vsel %vm1256, %v1263, %v1252
        %v1266 = vpack.c.bf16 %v1260, %v1259
        %v1267 = vpack.c.bf16 %v1265, %v1264
        %v1268 = vadd.f32 %v1259, %v1264
        %v1269 = vadd.f32 %v1260, %v1265
        %v1270 = vpack.c.bf16 %v1269, %v1268
        %1271 = vmatprep.subr.bf16.mxu0 0
        %1272 = vmatpush1.bf16.msra.mxu0 %v1266
        %1273 = vmatprep.subr.bf16.mxu0 0
        %1274 = vmatpush1.bf16.msra.mxu0 0
        %1275 = vmatprep.subr.bf16.mxu0 0
        %1276 = vmatpush1.bf16.msra.mxu0 0
        %1277 = vmatprep.subr.bf16.mxu0 0
        %1278 = vmatpush1.bf16.msra.mxu0 0
        %1279 = vmatprep.subr.bf16.mxu0 0
        %1280 = vmatpush1.bf16.msra.mxu0 0
        %1281 = vmatprep.subr.bf16.mxu0 0
        %1282 = vmatpush1.bf16.msra.mxu0 0
        %1283 = vmatprep.subr.bf16.mxu0 0
        %1284 = vmatpush1.bf16.msra.mxu0 0
        %1285 = vmatprep.subr.bf16.mxu0 0
        %1286 = vmatpush1.bf16.msra.mxu0 0
        %1287 = vmatprep.subr.bf16.mxu0 0
        %1288 = vmatpush1.bf16.msra.mxu0 0
        %1289 = vmatprep.subr.bf16.mxu0 0
        %1290 = vmatpush1.bf16.msra.mxu0 0
        %1291 = vmatprep.subr.bf16.mxu0 0
        %1292 = vmatpush1.bf16.msra.mxu0 0
        %1293 = vmatprep.subr.bf16.mxu0 0
        %1294 = vmatpush1.bf16.msra.mxu0 0
        %1295 = vmatprep.subr.bf16.mxu0 0
        %1296 = vmatpush1.bf16.msra.mxu0 0
        %1297 = vmatprep.subr.bf16.mxu0 0
        %1298 = vmatpush1.bf16.msra.mxu0 0
        %1299 = vmatprep.subr.bf16.mxu0 0
        %1300 = vmatpush1.bf16.msra.mxu0 0
        %1301 = vmatprep.subr.bf16.mxu0 0
        %1302 = vmatpush1.bf16.msra.mxu0 0
        %1303 = vmatprep.mubr.bf16.mxu0 0
        %1304 = vmatmul.mubr.bf16.gmra.mrb[0].mxu0 %v301
        %v1305 = vpop.f32.mrb[0].mxu0
        %v1306 = vadd.f32 0.0, %v1305
        %v1307 = vpop.f32.mrb[0].mxu0
        %v1308 = vpop.f32.mrb[0].mxu0
        %v1309 = vadd.f32 0.0, %v1308
        %v1310 = vpop.f32.mrb[0].mxu0
        %1311 = vdwg.mxu0
        %1312 = vmatprep.subr.bf16.mxu0 0
        %1313 = vmatpush1.bf16.msra.mxu0 %v1266
        %1314 = vmatprep.subr.bf16.mxu0 0
        %1315 = vmatpush1.bf16.msra.mxu0 0
        %1316 = vmatprep.subr.bf16.mxu0 0
        %1317 = vmatpush1.bf16.msra.mxu0 0
        %1318 = vmatprep.subr.bf16.mxu0 0
        %1319 = vmatpush1.bf16.msra.mxu0 0
        %1320 = vmatprep.subr.bf16.mxu0 0
        %1321 = vmatpush1.bf16.msra.mxu0 0
        %1322 = vmatprep.subr.bf16.mxu0 0
        %1323 = vmatpush1.bf16.msra.mxu0 0
        %1324 = vmatprep.subr.bf16.mxu0 0
        %1325 = vmatpush1.bf16.msra.mxu0 0
        %1326 = vmatprep.subr.bf16.mxu0 0
        %1327 = vmatpush1.bf16.msra.mxu0 0
        %1328 = vmatprep.subr.bf16.mxu0 0
        %1329 = vmatpush1.bf16.msra.mxu0 0
        %1330 = vmatprep.subr.bf16.mxu0 0
        %1331 = vmatpush1.bf16.msra.mxu0 0
        %1332 = vmatprep.subr.bf16.mxu0 0
        %1333 = vmatpush1.bf16.msra.mxu0 0
        %1334 = vmatprep.subr.bf16.mxu0 0
        %1335 = vmatpush1.bf16.msra.mxu0 0
        %1336 = vmatprep.subr.bf16.mxu0 0
        %1337 = vmatpush1.bf16.msra.mxu0 0
        %1338 = vmatprep.subr.bf16.mxu0 0
        %1339 = vmatpush1.bf16.msra.mxu0 0
        %1340 = vmatprep.subr.bf16.mxu0 0
        %1341 = vmatpush1.bf16.msra.mxu0 0
        %1342 = vmatprep.subr.bf16.mxu0 0
        %1343 = vmatpush1.bf16.msra.mxu0 0
        %1344 = vmatprep.mubr.bf16.mxu0 0
        %1345 = vmatmul.mubr.bf16.gmra.mrb[0].mxu0 %v350
        %v1346 = vpop.f32.mrb[0].mxu0
        %v1347 = vadd.f32 %v1306, %v1346
        %v1348 = vpop.f32.mrb[0].mxu0
        %v1349 = vpop.f32.mrb[0].mxu0
        %v1350 = vadd.f32 %v1309, %v1349
        %v1351 = vpop.f32.mrb[0].mxu0
        %1352 = vdwg.mxu0
        %1353 = vmatprep.subr.bf16.mxu0 0
        %1354 = vmatpush1.bf16.msra.mxu0 %v1267
        %1355 = vmatprep.subr.bf16.mxu0 0
        %1356 = vmatpush1.bf16.msra.mxu0 0
        %1357 = vmatprep.subr.bf16.mxu0 0
        %1358 = vmatpush1.bf16.msra.mxu0 0
        %1359 = vmatprep.subr.bf16.mxu0 0
        %1360 = vmatpush1.bf16.msra.mxu0 0
        %1361 = vmatprep.subr.bf16.mxu0 0
        %1362 = vmatpush1.bf16.msra.mxu0 0
        %1363 = vmatprep.subr.bf16.mxu0 0
        %1364 = vmatpush1.bf16.msra.mxu0 0
        %1365 = vmatprep.subr.bf16.mxu0 0
        %1366 = vmatpush1.bf16.msra.mxu0 0
        %1367 = vmatprep.subr.bf16.mxu0 0
        %1368 = vmatpush1.bf16.msra.mxu0 0
        %1369 = vmatprep.subr.bf16.mxu0 0
        %1370 = vmatpush1.bf16.msra.mxu0 0
        %1371 = vmatprep.subr.bf16.mxu0 0
        %1372 = vmatpush1.bf16.msra.mxu0 0
        %1373 = vmatprep.subr.bf16.mxu0 0
        %1374 = vmatpush1.bf16.msra.mxu0 0
        %1375 = vmatprep.subr.bf16.mxu0 0
        %1376 = vmatpush1.bf16.msra.mxu0 0
        %1377 = vmatprep.subr.bf16.mxu0 0
        %1378 = vmatpush1.bf16.msra.mxu0 0
        %1379 = vmatprep.subr.bf16.mxu0 0
        %1380 = vmatpush1.bf16.msra.mxu0 0
        %1381 = vmatprep.subr.bf16.mxu0 0
        %1382 = vmatpush1.bf16.msra.mxu0 0
        %1383 = vmatprep.subr.bf16.mxu0 0
        %1384 = vmatpush1.bf16.msra.mxu0 0
        %1385 = vmatprep.mubr.bf16.mxu0 0
        %1386 = vmatmul.mubr.bf16.gmra.mrb[0].mxu0 %v405
        %v1387 = vpop.f32.mrb[0].mxu0
        %v1388 = vadd.f32 0.0, %v1387
        %v1389 = vpop.f32.mrb[0].mxu0
        %v1390 = vpop.f32.mrb[0].mxu0
        %v1391 = vadd.f32 0.0, %v1390
        %v1392 = vpop.f32.mrb[0].mxu0
        %1393 = vdwg.mxu0
        %1394 = vmatprep.subr.bf16.mxu0 0
        %1395 = vmatpush1.bf16.msra.mxu0 %v1267
        %1396 = vmatprep.subr.bf16.mxu0 0
        %1397 = vmatpush1.bf16.msra.mxu0 0
        %1398 = vmatprep.subr.bf16.mxu0 0
        %1399 = vmatpush1.bf16.msra.mxu0 0
        %1400 = vmatprep.subr.bf16.mxu0 0
        %1401 = vmatpush1.bf16.msra.mxu0 0
        %1402 = vmatprep.subr.bf16.mxu0 0
        %1403 = vmatpush1.bf16.msra.mxu0 0
        %1404 = vmatprep.subr.bf16.mxu0 0
        %1405 = vmatpush1.bf16.msra.mxu0 0
        %1406 = vmatprep.subr.bf16.mxu0 0
        %1407 = vmatpush1.bf16.msra.mxu0 0
        %1408 = vmatprep.subr.bf16.mxu0 0
        %1409 = vmatpush1.bf16.msra.mxu0 0
        %1410 = vmatprep.subr.bf16.mxu0 0
        %1411 = vmatpush1.bf16.msra.mxu0 0
        %1412 = vmatprep.subr.bf16.mxu0 0
        %1413 = vmatpush1.bf16.msra.mxu0 0
        %1414 = vmatprep.subr.bf16.mxu0 0
        %1415 = vmatpush1.bf16.msra.mxu0 0
        %1416 = vmatprep.subr.bf16.mxu0 0
        %1417 = vmatpush1.bf16.msra.mxu0 0
        %1418 = vmatprep.subr.bf16.mxu0 0
        %1419 = vmatpush1.bf16.msra.mxu0 0
        %1420 = vmatprep.subr.bf16.mxu0 0
        %1421 = vmatpush1.bf16.msra.mxu0 0
        %1422 = vmatprep.subr.bf16.mxu0 0
        %1423 = vmatpush1.bf16.msra.mxu0 0
        %1424 = vmatprep.subr.bf16.mxu0 0
        %1425 = vmatpush1.bf16.msra.mxu0 0
        %1426 = vmatprep.mubr.bf16.mxu0 0
        %1427 = vmatmul.mubr.bf16.gmra.mrb[0].mxu0 %v454
        %v1428 = vpop.f32.mrb[0].mxu0
        %v1429 = vadd.f32 %v1388, %v1428
        %v1430 = vpop.f32.mrb[0].mxu0
        %v1431 = vpop.f32.mrb[0].mxu0
        %v1432 = vadd.f32 %v1391, %v1431
        %v1433 = vpop.f32.mrb[0].mxu0
        %1434 = vdwg.mxu0
        %s1435 = scalar_lea.vmem %s3, 24
        %v1436 = vld [vmem:[%s1435] sm:$0xf]
        %v1437 = vld [vmem:[%s1435 + $0x4] sm:$0xf]
        %s1438 = scalar_lea.vmem %s3, 56
        %v1439 = vld [vmem:[%s1438] sm:$0xf]
        %v1440 = vld [vmem:[%s1438 + $0x4] sm:$0xf]
        %v1443 = vunpack.c.l.b16 %v1439
        %v1444 = vunpack.c.l.b16 %v1440
        %v1445 = vpack.c.b16 %v1444, %v1443
        %v1447 = vsel %vm299, %v1445, 0
        %1449 = vmatprep.subr.bf16.mxu0 0
        %1450 = vmatpush1.bf16.msra.mxu0 %v1270
        %1451 = vmatprep.subr.bf16.mxu0 0
        %1452 = vmatpush1.bf16.msra.mxu0 0
        %1453 = vmatprep.subr.bf16.mxu0 0
        %1454 = vmatpush1.bf16.msra.mxu0 0
        %1455 = vmatprep.subr.bf16.mxu0 0
        %1456 = vmatpush1.bf16.msra.mxu0 0
        %1457 = vmatprep.subr.bf16.mxu0 0
        %1458 = vmatpush1.bf16.msra.mxu0 0
        %1459 = vmatprep.subr.bf16.mxu0 0
        %1460 = vmatpush1.bf16.msra.mxu0 0
        %1461 = vmatprep.subr.bf16.mxu0 0
        %1462 = vmatpush1.bf16.msra.mxu0 0
        %1463 = vmatprep.subr.bf16.mxu0 0
        %1464 = vmatpush1.bf16.msra.mxu0 0
        %1465 = vmatprep.subr.bf16.mxu0 0
        %1466 = vmatpush1.bf16.msra.mxu0 0
        %1467 = vmatprep.subr.bf16.mxu0 0
        %1468 = vmatpush1.bf16.msra.mxu0 0
        %1469 = vmatprep.subr.bf16.mxu0 0
        %1470 = vmatpush1.bf16.msra.mxu0 0
        %1471 = vmatprep.subr.bf16.mxu0 0
        %1472 = vmatpush1.bf16.msra.mxu0 0
        %1473 = vmatprep.subr.bf16.mxu0 0
        %1474 = vmatpush1.bf16.msra.mxu0 0
        %1475 = vmatprep.subr.bf16.mxu0 0
        %1476 = vmatpush1.bf16.msra.mxu0 0
        %1477 = vmatprep.subr.bf16.mxu0 0
        %1478 = vmatpush1.bf16.msra.mxu0 0
        %1479 = vmatprep.subr.bf16.mxu0 0
        %1480 = vmatpush1.bf16.msra.mxu0 0
        %1481 = vmatprep.mubr.bf16.mxu0 0
        %1482 = vmatmul.mubr.bf16.gmra.mrb[0].mxu0 %v1447
        %v1483 = vpop.f32.mrb[0].mxu0
        %v1484 = vadd.f32 0.0, %v1483
        %v1485 = vpop.f32.mrb[0].mxu0
        %v1486 = vpop.f32.mrb[0].mxu0
        %v1487 = vadd.f32 0.0, %v1486
        %v1488 = vpop.f32.mrb[0].mxu0
        %1489 = vdwg.mxu0
        %v1492 = vunpack.c.l.b16 %v1436
        %v1493 = vunpack.c.l.b16 %v1437
        %v1494 = vpack.c.b16 %v1493, %v1492
        %v1496 = vsel %vm299, %v1494, 0
        %1498 = vmatprep.subr.bf16.mxu0 0
        %1499 = vmatpush1.bf16.msra.mxu0 %v1270
        %1500 = vmatprep.subr.bf16.mxu0 0
        %1501 = vmatpush1.bf16.msra.mxu0 0
        %1502 = vmatprep.subr.bf16.mxu0 0
        %1503 = vmatpush1.bf16.msra.mxu0 0
        %1504 = vmatprep.subr.bf16.mxu0 0
        %1505 = vmatpush1.bf16.msra.mxu0 0
        %1506 = vmatprep.subr.bf16.mxu0 0
        %1507 = vmatpush1.bf16.msra.mxu0 0
        %1508 = vmatprep.subr.bf16.mxu0 0
        %1509 = vmatpush1.bf16.msra.mxu0 0
        %1510 = vmatprep.subr.bf16.mxu0 0
        %1511 = vmatpush1.bf16.msra.mxu0 0
        %1512 = vmatprep.subr.bf16.mxu0 0
        %1513 = vmatpush1.bf16.msra.mxu0 0
        %1514 = vmatprep.subr.bf16.mxu0 0
        %1515 = vmatpush1.bf16.msra.mxu0 0
        %1516 = vmatprep.subr.bf16.mxu0 0
        %1517 = vmatpush1.bf16.msra.mxu0 0
        %1518 = vmatprep.subr.bf16.mxu0 0
        %1519 = vmatpush1.bf16.msra.mxu0 0
        %1520 = vmatprep.subr.bf16.mxu0 0
        %1521 = vmatpush1.bf16.msra.mxu0 0
        %1522 = vmatprep.subr.bf16.mxu0 0
        %1523 = vmatpush1.bf16.msra.mxu0 0
        %1524 = vmatprep.subr.bf16.mxu0 0
        %1525 = vmatpush1.bf16.msra.mxu0 0
        %1526 = vmatprep.subr.bf16.mxu0 0
        %1527 = vmatpush1.bf16.msra.mxu0 0
        %1528 = vmatprep.subr.bf16.mxu0 0
        %1529 = vmatpush1.bf16.msra.mxu0 0
        %1530 = vmatprep.mubr.bf16.mxu0 0
        %1531 = vmatmul.mubr.bf16.gmra.mrb[0].mxu0 %v1496
        %v1532 = vpop.f32.mrb[0].mxu0
        %v1533 = vadd.f32 %v1484, %v1532
        %v1534 = vpop.f32.mrb[0].mxu0
        %v1535 = vpop.f32.mrb[0].mxu0
        %v1536 = vadd.f32 %v1487, %v1535
        %v1537 = vpop.f32.mrb[0].mxu0
        %1538 = vdwg.mxu0
        %v1539 = vadd.f32 %v1347, %v1429
        %v1540 = vadd.f32 %v1350, %v1432
        %v1541 = vsub.f32 %v1533, %v1347
        %v1542 = vsub.f32 %v1536, %v1350
        %v1543 = vadd.f32 %v1541, %v1429
        %v1544 = vadd.f32 %v1542, %v1432
        %v1545 = vpack.c.bf16 %v1540, %v1539
        %v1546 = vpack.c.bf16 %v1544, %v1543
        %v1547 = vadd.f32 %v1539, %v1543
        %v1548 = vadd.f32 %v1540, %v1544
        %v1549 = vpack.c.bf16 %v1548, %v1547
        %1550 = vmatprep.subr.bf16.mxu0 0
        %1551 = vmatpush1.bf16.msra.mxu0 %v677
        %1552 = vmatprep.subr.bf16.mxu0 0
        %1553 = vmatpush1.bf16.msra.mxu0 %v678
        %1554 = vmatprep.subr.bf16.mxu0 0
        %1555 = vmatpush1.bf16.msra.mxu0 %v679
        %1556 = vmatprep.subr.bf16.mxu0 0
        %1557 = vmatpush1.bf16.msra.mxu0 %v680
        %1558 = vmatprep.subr.bf16.mxu0 0
        %1559 = vmatpush1.bf16.msra.mxu0 %v681
        %1560 = vmatprep.subr.bf16.mxu0 0
        %1561 = vmatpush1.bf16.msra.mxu0 %v682
        %1562 = vmatprep.subr.bf16.mxu0 0
        %1563 = vmatpush1.bf16.msra.mxu0 %v683
        %1564 = vmatprep.subr.bf16.mxu0 0
        %1565 = vmatpush1.bf16.msra.mxu0 %v684
        %1566 = vmatprep.subr.bf16.mxu0 0
        %1567 = vmatpush1.bf16.msra.mxu0 0
        %1568 = vmatprep.subr.bf16.mxu0 0
        %1569 = vmatpush1.bf16.msra.mxu0 0
        %1570 = vmatprep.subr.bf16.mxu0 0
        %1571 = vmatpush1.bf16.msra.mxu0 0
        %1572 = vmatprep.subr.bf16.mxu0 0
        %1573 = vmatpush1.bf16.msra.mxu0 0
        %1574 = vmatprep.subr.bf16.mxu0 0
        %1575 = vmatpush1.bf16.msra.mxu0 0
        %1576 = vmatprep.subr.bf16.mxu0 0
        %1577 = vmatpush1.bf16.msra.mxu0 0
        %1578 = vmatprep.subr.bf16.mxu0 0
        %1579 = vmatpush1.bf16.msra.mxu0 0
        %1580 = vmatprep.subr.bf16.mxu0 0
        %1581 = vmatpush1.bf16.msra.mxu0 0
        %1582 = vmatprep.mubr.bf16.mxu0 0
        %1583 = vmatmul.mubr.bf16.gmra.mrb[0].mxu0 %v1545
        %v1584 = vpop.f32.mrb[0].mxu0
        %v1585 = vadd.f32 0.0, %v1584
        %v1586 = vpop.f32.mrb[0].mxu0
        %v1587 = vpop.f32.mrb[0].mxu0
        %v1588 = vadd.f32 0.0, %v1587
        %v1589 = vpop.f32.mrb[0].mxu0
        %1590 = vdwg.mxu0
        %1591 = vmatprep.subr.bf16.mxu0 0
        %1592 = vmatpush1.bf16.msra.mxu0 %v766
        %1593 = vmatprep.subr.bf16.mxu0 0
        %1594 = vmatpush1.bf16.msra.mxu0 %v767
        %1595 = vmatprep.subr.bf16.mxu0 0
        %1596 = vmatpush1.bf16.msra.mxu0 %v768
        %1597 = vmatprep.subr.bf16.mxu0 0
        %1598 = vmatpush1.bf16.msra.mxu0 %v769
        %1599 = vmatprep.subr.bf16.mxu0 0
        %1600 = vmatpush1.bf16.msra.mxu0 %v770
        %1601 = vmatprep.subr.bf16.mxu0 0
        %1602 = vmatpush1.bf16.msra.mxu0 %v771
        %1603 = vmatprep.subr.bf16.mxu0 0
        %1604 = vmatpush1.bf16.msra.mxu0 %v772
        %1605 = vmatprep.subr.bf16.mxu0 0
        %1606 = vmatpush1.bf16.msra.mxu0 %v773
        %1607 = vmatprep.subr.bf16.mxu0 0
        %1608 = vmatpush1.bf16.msra.mxu0 0
        %1609 = vmatprep.subr.bf16.mxu0 0
        %1610 = vmatpush1.bf16.msra.mxu0 0
        %1611 = vmatprep.subr.bf16.mxu0 0
        %1612 = vmatpush1.bf16.msra.mxu0 0
        %1613 = vmatprep.subr.bf16.mxu0 0
        %1614 = vmatpush1.bf16.msra.mxu0 0
        %1615 = vmatprep.subr.bf16.mxu0 0
        %1616 = vmatpush1.bf16.msra.mxu0 0
        %1617 = vmatprep.subr.bf16.mxu0 0
        %1618 = vmatpush1.bf16.msra.mxu0 0
        %1619 = vmatprep.subr.bf16.mxu0 0
        %1620 = vmatpush1.bf16.msra.mxu0 0
        %1621 = vmatprep.subr.bf16.mxu0 0
        %1622 = vmatpush1.bf16.msra.mxu0 0
        %1623 = vmatprep.mubr.bf16.mxu0 0
        %1624 = vmatmul.mubr.bf16.gmra.mrb[0].mxu0 %v1545
        %v1625 = vpop.f32.mrb[0].mxu0
        %v1626 = vadd.f32 %v1585, %v1625
        %v1627 = vpop.f32.mrb[0].mxu0
        %v1628 = vpop.f32.mrb[0].mxu0
        %v1629 = vadd.f32 %v1588, %v1628
        %v1630 = vpop.f32.mrb[0].mxu0
        %1631 = vdwg.mxu0
        %1632 = vmatprep.subr.bf16.mxu0 0
        %1633 = vmatpush1.bf16.msra.mxu0 %v889
        %1634 = vmatprep.subr.bf16.mxu0 0
        %1635 = vmatpush1.bf16.msra.mxu0 %v890
        %1636 = vmatprep.subr.bf16.mxu0 0
        %1637 = vmatpush1.bf16.msra.mxu0 %v891
        %1638 = vmatprep.subr.bf16.mxu0 0
        %1639 = vmatpush1.bf16.msra.mxu0 %v892
        %1640 = vmatprep.subr.bf16.mxu0 0
        %1641 = vmatpush1.bf16.msra.mxu0 %v893
        %1642 = vmatprep.subr.bf16.mxu0 0
        %1643 = vmatpush1.bf16.msra.mxu0 %v894
        %1644 = vmatprep.subr.bf16.mxu0 0
        %1645 = vmatpush1.bf16.msra.mxu0 %v895
        %1646 = vmatprep.subr.bf16.mxu0 0
        %1647 = vmatpush1.bf16.msra.mxu0 %v896
        %1648 = vmatprep.subr.bf16.mxu0 0
        %1649 = vmatpush1.bf16.msra.mxu0 0
        %1650 = vmatprep.subr.bf16.mxu0 0
        %1651 = vmatpush1.bf16.msra.mxu0 0
        %1652 = vmatprep.subr.bf16.mxu0 0
        %1653 = vmatpush1.bf16.msra.mxu0 0
        %1654 = vmatprep.subr.bf16.mxu0 0
        %1655 = vmatpush1.bf16.msra.mxu0 0
        %1656 = vmatprep.subr.bf16.mxu0 0
        %1657 = vmatpush1.bf16.msra.mxu0 0
        %1658 = vmatprep.subr.bf16.mxu0 0
        %1659 = vmatpush1.bf16.msra.mxu0 0
        %1660 = vmatprep.subr.bf16.mxu0 0
        %1661 = vmatpush1.bf16.msra.mxu0 0
        %1662 = vmatprep.subr.bf16.mxu0 0
        %1663 = vmatpush1.bf16.msra.mxu0 0
        %1664 = vmatprep.mubr.bf16.mxu0 0
        %1665 = vmatmul.mubr.bf16.gmra.mrb[0].mxu0 %v1546
        %v1666 = vpop.f32.mrb[0].mxu0
        %v1667 = vadd.f32 0.0, %v1666
        %v1668 = vpop.f32.mrb[0].mxu0
        %v1669 = vpop.f32.mrb[0].mxu0
        %v1670 = vadd.f32 0.0, %v1669
        %v1671 = vpop.f32.mrb[0].mxu0
        %1672 = vdwg.mxu0
        %1673 = vmatprep.subr.bf16.mxu0 0
        %1674 = vmatpush1.bf16.msra.mxu0 %v978
        %1675 = vmatprep.subr.bf16.mxu0 0
        %1676 = vmatpush1.bf16.msra.mxu0 %v979
        %1677 = vmatprep.subr.bf16.mxu0 0
        %1678 = vmatpush1.bf16.msra.mxu0 %v980
        %1679 = vmatprep.subr.bf16.mxu0 0
        %1680 = vmatpush1.bf16.msra.mxu0 %v981
        %1681 = vmatprep.subr.bf16.mxu0 0
        %1682 = vmatpush1.bf16.msra.mxu0 %v982
        %1683 = vmatprep.subr.bf16.mxu0 0
        %1684 = vmatpush1.bf16.msra.mxu0 %v983
        %1685 = vmatprep.subr.bf16.mxu0 0
        %1686 = vmatpush1.bf16.msra.mxu0 %v984
        %1687 = vmatprep.subr.bf16.mxu0 0
        %1688 = vmatpush1.bf16.msra.mxu0 %v985
        %1689 = vmatprep.subr.bf16.mxu0 0
        %1690 = vmatpush1.bf16.msra.mxu0 0
        %1691 = vmatprep.subr.bf16.mxu0 0
        %1692 = vmatpush1.bf16.msra.mxu0 0
        %1693 = vmatprep.subr.bf16.mxu0 0
        %1694 = vmatpush1.bf16.msra.mxu0 0
        %1695 = vmatprep.subr.bf16.mxu0 0
        %1696 = vmatpush1.bf16.msra.mxu0 0
        %1697 = vmatprep.subr.bf16.mxu0 0
        %1698 = vmatpush1.bf16.msra.mxu0 0
        %1699 = vmatprep.subr.bf16.mxu0 0
        %1700 = vmatpush1.bf16.msra.mxu0 0
        %1701 = vmatprep.subr.bf16.mxu0 0
        %1702 = vmatpush1.bf16.msra.mxu0 0
        %1703 = vmatprep.subr.bf16.mxu0 0
        %1704 = vmatpush1.bf16.msra.mxu0 0
        %1705 = vmatprep.mubr.bf16.mxu0 0
        %1706 = vmatmul.mubr.bf16.gmra.mrb[0].mxu0 %v1546
        %v1707 = vpop.f32.mrb[0].mxu0
        %v1708 = vadd.f32 %v1667, %v1707
        %v1709 = vpop.f32.mrb[0].mxu0
        %v1710 = vpop.f32.mrb[0].mxu0
        %v1711 = vadd.f32 %v1670, %v1710
        %v1712 = vpop.f32.mrb[0].mxu0
        %1713 = vdwg.mxu0
        %s1714 = scalar_lea.vmem [#allocation2], 192
        %v1715 = vld [vmem:[%s1714] sm:$0xf]
        %v1716 = vld [vmem:[%s1714 + $0x4] sm:$0xf]
        %v1717 = vld [vmem:[%s1714 + $0x8] sm:$0xf]
        %v1718 = vld [vmem:[%s1714 + $0xc] sm:$0xf]
        %v1719 = vld [vmem:[%s1714 + $0x10] sm:$0xf]
        %v1720 = vld [vmem:[%s1714 + $0x14] sm:$0xf]
        %v1721 = vld [vmem:[%s1714 + $0x18] sm:$0xf]
        %v1722 = vld [vmem:[%s1714 + $0x1c] sm:$0xf]
        %v1723 = vld [vmem:[%s1714 + $0x20] sm:$0xf]
        %v1724 = vld [vmem:[%s1714 + $0x24] sm:$0xf]
        %v1725 = vld [vmem:[%s1714 + $0x28] sm:$0xf]
        %v1726 = vld [vmem:[%s1714 + $0x2c] sm:$0xf]
        %v1727 = vld [vmem:[%s1714 + $0x30] sm:$0xf]
        %v1728 = vld [vmem:[%s1714 + $0x34] sm:$0xf]
        %v1729 = vld [vmem:[%s1714 + $0x38] sm:$0xf]
        %v1730 = vld [vmem:[%s1714 + $0x3c] sm:$0xf]
        %s1731 = scalar_lea.vmem [#allocation2], 448
        %v1732 = vld [vmem:[%s1731] sm:$0xf]
        %v1733 = vld [vmem:[%s1731 + $0x4] sm:$0xf]
        %v1734 = vld [vmem:[%s1731 + $0x8] sm:$0xf]
        %v1735 = vld [vmem:[%s1731 + $0xc] sm:$0xf]
        %v1736 = vld [vmem:[%s1731 + $0x10] sm:$0xf]
        %v1737 = vld [vmem:[%s1731 + $0x14] sm:$0xf]
        %v1738 = vld [vmem:[%s1731 + $0x18] sm:$0xf]
        %v1739 = vld [vmem:[%s1731 + $0x1c] sm:$0xf]
        %v1740 = vld [vmem:[%s1731 + $0x20] sm:$0xf]
        %v1741 = vld [vmem:[%s1731 + $0x24] sm:$0xf]
        %v1742 = vld [vmem:[%s1731 + $0x28] sm:$0xf]
        %v1743 = vld [vmem:[%s1731 + $0x2c] sm:$0xf]
        %v1744 = vld [vmem:[%s1731 + $0x30] sm:$0xf]
        %v1745 = vld [vmem:[%s1731 + $0x34] sm:$0xf]
        %v1746 = vld [vmem:[%s1731 + $0x38] sm:$0xf]
        %v1747 = vld [vmem:[%s1731 + $0x3c] sm:$0xf]
        %v1764 = vunpack.c.l.b16 %v1732
        %v1765 = vunpack.c.l.b16 %v1733
        %v1766 = vunpack.c.l.b16 %v1734
        %v1767 = vunpack.c.l.b16 %v1735
        %v1768 = vunpack.c.l.b16 %v1736
        %v1769 = vunpack.c.l.b16 %v1737
        %v1770 = vunpack.c.l.b16 %v1738
        %v1771 = vunpack.c.l.b16 %v1739
        %v1772 = vunpack.c.l.b16 %v1740
        %v1773 = vunpack.c.l.b16 %v1741
        %v1774 = vunpack.c.l.b16 %v1742
        %v1775 = vunpack.c.l.b16 %v1743
        %v1776 = vunpack.c.l.b16 %v1744
        %v1777 = vunpack.c.l.b16 %v1745
        %v1778 = vunpack.c.l.b16 %v1746
        %v1779 = vunpack.c.l.b16 %v1747
        %v1780 = vpack.c.b16 %v1765, %v1764
        %v1781 = vpack.c.b16 %v1767, %v1766
        %v1782 = vpack.c.b16 %v1769, %v1768
        %v1783 = vpack.c.b16 %v1771, %v1770
        %v1784 = vpack.c.b16 %v1773, %v1772
        %v1785 = vpack.c.b16 %v1775, %v1774
        %v1786 = vpack.c.b16 %v1777, %v1776
        %v1787 = vpack.c.b16 %v1779, %v1778
        %1796 = vmatprep.subr.bf16.mxu0 0
        %1797 = vmatpush1.bf16.msra.mxu0 %v1780
        %1798 = vmatprep.subr.bf16.mxu0 0
        %1799 = vmatpush1.bf16.msra.mxu0 %v1781
        %1800 = vmatprep.subr.bf16.mxu0 0
        %1801 = vmatpush1.bf16.msra.mxu0 %v1782
        %1802 = vmatprep.subr.bf16.mxu0 0
        %1803 = vmatpush1.bf16.msra.mxu0 %v1783
        %1804 = vmatprep.subr.bf16.mxu0 0
        %1805 = vmatpush1.bf16.msra.mxu0 %v1784
        %1806 = vmatprep.subr.bf16.mxu0 0
        %1807 = vmatpush1.bf16.msra.mxu0 %v1785
        %1808 = vmatprep.subr.bf16.mxu0 0
        %1809 = vmatpush1.bf16.msra.mxu0 %v1786
        %1810 = vmatprep.subr.bf16.mxu0 0
        %1811 = vmatpush1.bf16.msra.mxu0 %v1787
        %1812 = vmatprep.subr.bf16.mxu0 0
        %1813 = vmatpush1.bf16.msra.mxu0 0
        %1814 = vmatprep.subr.bf16.mxu0 0
        %1815 = vmatpush1.bf16.msra.mxu0 0
        %1816 = vmatprep.subr.bf16.mxu0 0
        %1817 = vmatpush1.bf16.msra.mxu0 0
        %1818 = vmatprep.subr.bf16.mxu0 0
        %1819 = vmatpush1.bf16.msra.mxu0 0
        %1820 = vmatprep.subr.bf16.mxu0 0
        %1821 = vmatpush1.bf16.msra.mxu0 0
        %1822 = vmatprep.subr.bf16.mxu0 0
        %1823 = vmatpush1.bf16.msra.mxu0 0
        %1824 = vmatprep.subr.bf16.mxu0 0
        %1825 = vmatpush1.bf16.msra.mxu0 0
        %1826 = vmatprep.subr.bf16.mxu0 0
        %1827 = vmatpush1.bf16.msra.mxu0 0
        %1828 = vmatprep.mubr.bf16.mxu0 0
        %1829 = vmatmul.mubr.bf16.gmra.mrb[0].mxu0 %v1549
        %v1830 = vpop.f32.mrb[0].mxu0
        %v1831 = vadd.f32 0.0, %v1830
        %v1832 = vpop.f32.mrb[0].mxu0
        %v1833 = vpop.f32.mrb[0].mxu0
        %v1834 = vadd.f32 0.0, %v1833
        %v1835 = vpop.f32.mrb[0].mxu0
        %1836 = vdwg.mxu0
        %v1853 = vunpack.c.l.b16 %v1715
        %v1854 = vunpack.c.l.b16 %v1716
        %v1855 = vunpack.c.l.b16 %v1717
        %v1856 = vunpack.c.l.b16 %v1718
        %v1857 = vunpack.c.l.b16 %v1719
        %v1858 = vunpack.c.l.b16 %v1720
        %v1859 = vunpack.c.l.b16 %v1721
        %v1860 = vunpack.c.l.b16 %v1722
        %v1861 = vunpack.c.l.b16 %v1723
        %v1862 = vunpack.c.l.b16 %v1724
        %v1863 = vunpack.c.l.b16 %v1725
        %v1864 = vunpack.c.l.b16 %v1726
        %v1865 = vunpack.c.l.b16 %v1727
        %v1866 = vunpack.c.l.b16 %v1728
        %v1867 = vunpack.c.l.b16 %v1729
        %v1868 = vunpack.c.l.b16 %v1730
        %v1869 = vpack.c.b16 %v1854, %v1853
        %v1870 = vpack.c.b16 %v1856, %v1855
        %v1871 = vpack.c.b16 %v1858, %v1857
        %v1872 = vpack.c.b16 %v1860, %v1859
        %v1873 = vpack.c.b16 %v1862, %v1861
        %v1874 = vpack.c.b16 %v1864, %v1863
        %v1875 = vpack.c.b16 %v1866, %v1865
        %v1876 = vpack.c.b16 %v1868, %v1867
        %1885 = vmatprep.subr.bf16.mxu0 0
        %1886 = vmatpush1.bf16.msra.mxu0 %v1869
        %1887 = vmatprep.subr.bf16.mxu0 0
        %1888 = vmatpush1.bf16.msra.mxu0 %v1870
        %1889 = vmatprep.subr.bf16.mxu0 0
        %1890 = vmatpush1.bf16.msra.mxu0 %v1871
        %1891 = vmatprep.subr.bf16.mxu0 0
        %1892 = vmatpush1.bf16.msra.mxu0 %v1872
        %1893 = vmatprep.subr.bf16.mxu0 0
        %1894 = vmatpush1.bf16.msra.mxu0 %v1873
        %1895 = vmatprep.subr.bf16.mxu0 0
        %1896 = vmatpush1.bf16.msra.mxu0 %v1874
        %1897 = vmatprep.subr.bf16.mxu0 0
        %1898 = vmatpush1.bf16.msra.mxu0 %v1875
        %1899 = vmatprep.subr.bf16.mxu0 0
        %1900 = vmatpush1.bf16.msra.mxu0 %v1876
        %1901 = vmatprep.subr.bf16.mxu0 0
        %1902 = vmatpush1.bf16.msra.mxu0 0
        %1903 = vmatprep.subr.bf16.mxu0 0
        %1904 = vmatpush1.bf16.msra.mxu0 0
        %1905 = vmatprep.subr.bf16.mxu0 0
        %1906 = vmatpush1.bf16.msra.mxu0 0
        %1907 = vmatprep.subr.bf16.mxu0 0
        %1908 = vmatpush1.bf16.msra.mxu0 0
        %1909 = vmatprep.subr.bf16.mxu0 0
        %1910 = vmatpush1.bf16.msra.mxu0 0
        %1911 = vmatprep.subr.bf16.mxu0 0
        %1912 = vmatpush1.bf16.msra.mxu0 0
        %1913 = vmatprep.subr.bf16.mxu0 0
        %1914 = vmatpush1.bf16.msra.mxu0 0
        %1915 = vmatprep.subr.bf16.mxu0 0
        %1916 = vmatpush1.bf16.msra.mxu0 0
        %1917 = vmatprep.mubr.bf16.mxu0 0
        %1918 = vmatmul.mubr.bf16.gmra.mrb[0].mxu0 %v1549
        %v1919 = vpop.f32.mrb[0].mxu0
        %v1920 = vadd.f32 %v1831, %v1919
        %v1921 = vpop.f32.mrb[0].mxu0
        %v1922 = vpop.f32.mrb[0].mxu0
        %v1923 = vadd.f32 %v1834, %v1922
        %v1924 = vpop.f32.mrb[0].mxu0
        %1925 = vdwg.mxu0
        %v1926 = vadd.f32 %v1626, %v1708
        %v1927 = vadd.f32 %v1629, %v1711
        %1928 = vst [vmem:[%s262] sm:$0xff] %v1926
        %1929 = vst [vmem:[%s262 + $0x8] sm:$0xff] %v1927
        %v1930 = vsub.f32 %v1920, %v1626
        %v1931 = vsub.f32 %v1923, %v1629
        %v1932 = vadd.f32 %v1930, %v1708
        %v1933 = vadd.f32 %v1931, %v1711
        %s1934 = scalar_lea.vmem %s262, 16 [#allocation5]
        %1935 = vst [vmem:[%s1934] sm:$0xff] %v1932
        %1936 = vst [vmem:[%s1934 + $0x8] sm:$0xff] %v1933
        %s1937 = sand.u32 %s148, 1
        %s1938 = scalar_lea.sflag [#allocation4], %s1937
        %s1939 = sand.u32 %s148, 1
        %s1940 = smul.addr %s1939, 32
        %s1941 = scalar_lea.vmem [#allocation5], %s1940
        // Predicated region
        $region45: #{data_consistency_in_kspace.1} parent=39 // pred_check
          %p1942 = pneg %p158
        $region46: #{data_consistency_in_kspace.1} parent=39 // pred_check_branch
          %1944 = sbr.rel (%p1942) target = $region48
        $region47: #{data_consistency_in_kspace.1} parent=39 // pred_region
          %s1946 = ssub.s32 512, 512
          %1947 = vsyncadd %s1938, %s1946
          %s1948 = smul.addr %s20, 4
          %s1949 = smul.addr %s1948, 128
          %s1950 = scalar_lea.hbm %s5, %s1949
          %s1951 = sshll.u32 %s1941, 4
          %s1952 = int_to_ptr.vmem [resolvable:$true] %s1951
          %1957 = dma.vmem_to_hbm [thread:$0]  %s1952, 512, %s1950, %s1938, 128, 128, 8
        $region48: #{data_consistency_in_kspace.1} parent=39 // pred_fallthru
          _
      $region40: #{data_consistency_in_kspace.1} parent=5 // pred_fallthru
        _
      %p1958 = scmp.le.s32.totalorder 2, %s15
      // Predicated region
      $region49: #{data_consistency_in_kspace.1} parent=5 // pred_check
        %p1959 = pneg %p1958
      $region50: #{data_consistency_in_kspace.1} parent=5 // pred_check_branch
        %1961 = sbr.rel (%p1959) target = $region52
      $region51: #{data_consistency_in_kspace.1} parent=5 // pred_region
        %s1962 = ssub.s32 %s15, 2
        // Predicated region
        $region53: #{data_consistency_in_kspace.1} parent=51 // pred_check
          %p1963 = pneg %p164
        $region54: #{data_consistency_in_kspace.1} parent=51 // pred_check_branch
          %1965 = sbr.rel (%p1963) target = $region56
        $region55: #{data_consistency_in_kspace.1} parent=51 // pred_region
          %s1966 = sand.u32 %s149, 1
          %s1967 = scalar_lea.sflag [#allocation4], %s1966
          %s1968 = sand.u32 %s149, 1
          %s1969 = smul.addr %s1968, 32
          %s1970 = scalar_lea.vmem [#allocation5], %s1969
          %1971 = dma.done %s1967, 512
        $region56: #{data_consistency_in_kspace.1} parent=51 // pred_fallthru
          _
      $region52: #{data_consistency_in_kspace.1} parent=5 // pred_fallthru
        _
    $region6: #{data_consistency_in_kspace.1} parent=1 // loop_footer
      %s19 = sadd.s32 1, %s15
    $region7: #{data_consistency_in_kspace.1} parent=1 // loop_footer_branch
      %14 = sbr.rel target = $region3
    $region8: #{data_consistency_in_kspace.1} parent=1 // loop_exit
      _
    %1972 = vsyncpa [#allocation3], 1
    %s1973 = scalar_lea.sflag [#allocation3], 1
    %1974 = vsyncpa %s1973, 1
    %1975 = vsyncpa [#allocation4], 1
    %s1976 = scalar_lea.sflag [#allocation4], 1
    %1977 = vsyncpa %s1976, 1

</llo_original>
